<compile_context>
chip_gen: v7x
topology: tpu7x:2x2x1
jax: 0.10.0
libtpu: 0.0.40
codegen_flags: <defaults>
</compile_context>

<pallas_src>
import math
import numpy as np

import jax
import jax.numpy as jnp
from jax.experimental import pallas as pl
from jax.experimental.pallas import tpu as pltpu


LANE = 128
_VMEM_BUDGET = 28 * 1024 * 1024   # per-call streamed working-set target (fits v5e/v6e/v7x)
_VMEM_LIMIT = 32 * 1024 * 1024    # scoped VMEM limit handed to Mosaic


# ----------------------------------------------------------------------------------
# numpy precompute: Wigner-d matrices, grids, quadrature weights, transform matrices
# ----------------------------------------------------------------------------------
def _fact(n):
    return math.factorial(n)


def wigner_d_matrix(l, beta):
    """d^l_{m,n}(beta); rows m = -l..l, cols n = -l..l (centered ordering)."""
    d = np.zeros((2 * l + 1, 2 * l + 1), dtype=np.float64)
    cb, sb = math.cos(beta / 2.0), math.sin(beta / 2.0)
    for mi, m in enumerate(range(-l, l + 1)):
        for ni, n in enumerate(range(-l, l + 1)):
            pref = math.sqrt(_fact(l + m) * _fact(l - m) * _fact(l + n) * _fact(l - n))
            smin, smax = max(0, n - m), min(l + n, l - m)
            tot = 0.0
            for s in range(smin, smax + 1):
                num = (-1.0) ** (m - n + s)
                den = _fact(l + n - s) * _fact(s) * _fact(m - n + s) * _fact(l - m - s)
                tot += num / den * cb ** (2 * l + n - m - 2 * s) * sb ** (m - n + 2 * s)
            d[mi, ni] = pref * tot
    return d


def dh_quadrature_weights(b):
    # Driscoll-Healy / SOFT quadrature weights on the beta grid of size 2b.
    k = np.arange(b)
    w = np.zeros(2 * b)
    for j in range(2 * b):
        w[j] = (2.0 / b) * math.sin(math.pi * (2 * j + 1) / (4 * b)) * np.sum(
            np.sin((2 * j + 1) * (2 * k + 1) * math.pi / (4 * b)) / (2 * k + 1))
    return w


def so3_near_identity_grid(max_beta=np.pi / 8, max_gamma=2 * np.pi,
                           n_alpha=8, n_beta=3, n_gamma=None):
    if n_gamma is None:
        n_gamma = n_alpha
    beta = np.arange(1, n_beta + 1, dtype=np.float64) * max_beta / n_beta
    alpha = np.linspace(0, 2 * np.pi, n_alpha, endpoint=False)
    pre_gamma = np.linspace(-max_gamma, max_gamma, n_gamma, endpoint=False)
    B, A, preC = np.meshgrid(beta, alpha, pre_gamma, indexing="ij")
    C = preC - A
    return np.stack([B.flatten(), A.flatten(), C.flatten()], axis=1)  # [n_grid, 3]


def so3_spec_size(b):
    return sum((2 * l + 1) ** 2 for l in range(b))


def so3_index(l, mi, ni):
    off = sum((2 * k + 1) ** 2 for k in range(l))
    return off + mi * (2 * l + 1) + ni


def make_so3_fft_matrix(b_in, b_out):
    """Tfwd[(l,m,n), beta*A*G + alpha*G + gamma], quadrature-weighted forward SO(3) FFT."""
    n2 = 2 * b_in
    betas = (np.arange(n2) + 0.5) / n2 * np.pi
    w = dh_quadrature_weights(b_in)
    ang = np.arange(n2) * 2 * np.pi / n2
    nspec = so3_spec_size(b_out)
    T = np.zeros((nspec, n2, n2, n2), dtype=np.complex128)
    for l in range(b_out):
        for bi, beta in enumerate(betas):
            d = wigner_d_matrix(l, beta)
            for mi, m in enumerate(range(-l, l + 1)):
                em = np.exp(-1j * m * ang)
                for ni, n in enumerate(range(-l, l + 1)):
                    en = np.exp(-1j * n * ang)
                    T[so3_index(l, mi, ni), bi] = w[bi] * d[mi, ni] * np.outer(em, en)
    return T.reshape(nspec, n2 ** 3)


def make_so3_rft_matrix(b_out, grid):
    """F[g, (l,m,n)] = conj(D^l_{m,n}(alpha_g, beta_g, gamma_g))."""
    n = len(grid)
    nspec = so3_spec_size(b_out)
    F = np.zeros((n, nspec), dtype=np.complex128)
    for g, (beta, alpha, gamma) in enumerate(grid):
        for l in range(b_out):
            d = wigner_d_matrix(l, beta)
            for mi, m in enumerate(range(-l, l + 1)):
                for ni, nn in enumerate(range(-l, l + 1)):
                    D = np.exp(-1j * m * alpha) * d[mi, ni] * np.exp(-1j * nn * gamma)
                    F[g, so3_index(l, mi, ni)] = np.conj(D)
    return F


def make_so3_ifft_matrix(b):
    """Tinv[(l,m,n), beta*A*G + alpha*G + gamma] (unweighted, factor 2l+1)."""
    n2 = 2 * b
    betas = (np.arange(n2) + 0.5) / n2 * np.pi
    ang = np.arange(n2) * 2 * np.pi / n2
    nspec = so3_spec_size(b)
    T = np.zeros((nspec, n2, n2, n2), dtype=np.complex128)
    for l in range(b):
        for bi, beta in enumerate(betas):
            d = wigner_d_matrix(l, beta)
            for mi, m in enumerate(range(-l, l + 1)):
                em = np.exp(1j * m * ang)
                for ni, n in enumerate(range(-l, l + 1)):
                    en = np.exp(1j * n * ang)
                    T[so3_index(l, mi, ni), bi] = (2 * l + 1) * d[mi, ni] * np.outer(em, en)
    return T.reshape(nspec, n2 ** 3)


# ----------------------------------------------------------------------------------
# constants: forward-FFT matrix and the fused "rft x so3_mm-blocks x ifft" tensor H
# ----------------------------------------------------------------------------------
def build_so3conv_constants(nfeature_in, b_in, b_out, grid):
    Tfwd = make_so3_fft_matrix(b_in, b_out)      # [P, S_in]   complex
    F = make_so3_rft_matrix(b_out, grid)         # [n_grid, P] complex
    Tinv = make_so3_ifft_matrix(b_out)           # [P, S_out]  complex
    P = so3_spec_size(b_out)
    S_in = (2 * b_in) ** 3
    S_out = (2 * b_out) ** 3
    n_grid = len(grid)
    scaling = 1.0 / math.sqrt(n_grid * nfeature_in * b_out ** 3.0 / b_in ** 3.0)

    # H[g, (l,m,n), s] = scaling * sum_{m'} Tinv[(l,m,m'), s] * F[g, (l,m',n)]
    # -> out[b,fo,s] = bias[fo] + Re( sum_{fi,(l,m,n)} conj(xhat[(l,m,n),b,fi]) *
    #                                 sum_g kernel[fi,fo,g] * H[g,(l,m,n),s] )
    H = np.zeros((n_grid, P, S_out), dtype=np.complex128)
    for l in range(b_out):
        L = 2 * l + 1
        off = so3_index(l, 0, 0)
        Fl = F[:, off:off + L * L].reshape(n_grid, L, L)        # [g, m', n]
        Tl = Tinv[off:off + L * L, :].reshape(L, L, S_out)      # [m, m', s]
        H[:, off:off + L * L, :] = np.einsum("gkn,mks->gmns", Fl, Tl).reshape(n_grid, L * L, S_out)
    H *= scaling

    # pre-concatenated real/imag stacks (built once, no per-call padding / concat)
    Tcat = np.concatenate([Tfwd.real.T, Tfwd.imag.T], axis=1)                  # [S_in, 2P]
    Hcat = np.concatenate([H.real.reshape(n_grid, P * S_out),
                           H.imag.reshape(n_grid, P * S_out)], axis=1)         # [n_grid, 2P*S_out]

    return dict(
        Tcat_np=Tcat, Hcat_np=Hcat,
        Tfwd_np=Tfwd, F_np=F, Tinv_np=Tinv, scaling=scaling,
        P=P, S_in=S_in, S_out=S_out, n_grid=n_grid,
    )


# ----------------------------------------------------------------------------------
# VMEM-budgeted, 128-aligned column tiling
# ----------------------------------------------------------------------------------
def _round_up(x, m):
    return ((x + m - 1) // m) * m


def _choose_tiles(n_cols, stream_bytes_per_col, resident_bytes, budget=_VMEM_BUDGET):
    """Largest 128-multiple column tile whose double-buffered streamed operands fit VMEM."""
    avail = max(budget - resident_bytes, 2 * LANE * stream_bytes_per_col)
    max_tile = max(LANE, (avail // (2 * stream_bytes_per_col)) // LANE * LANE)
    n_aligned = _round_up(max(n_cols, 1), LANE)
    tile = min(max_tile, n_aligned)
    gn = -(-n_aligned // tile)
    if gn > 1 and gn % 2 == 1:            # keep the parallel axis even for v7x megacore
        gn += 1
        tile = min(tile, _round_up(-(-n_aligned // gn), LANE))
        gn = -(-n_aligned // tile)
    return tile, gn, gn * tile


# ----------------------------------------------------------------------------------
# Pallas kernels
# ----------------------------------------------------------------------------------
def _fft_kernel(x_ref, t_ref, xc_ref):
    # forward SO(3) FFT (computed exactly once): [B*f_in, S_in] @ [S_in, 2P] -> Re|Im of xhat
    xc_ref[...] = jnp.dot(x_ref[...], t_ref[...], preferred_element_type=jnp.float32)


def _gop_kernel(k_ref, h_ref, g_ref):
    # fused (rft x so3_mm-blocks x ifft) operator, one N tile:
    # [f_in*f_out, n_grid](bf16) @ [n_grid, NT](bf16) -> bf16 (f32 accumulation on MXU)
    g_ref[...] = jnp.dot(k_ref[...], h_ref[...],
                         preferred_element_type=jnp.float32).astype(g_ref.dtype)


def _out_kernel(xc_ref, g_ref, b_ref, o_ref):
    # output matmul realizing so3_mm + inverse SO(3) FFT + bias on one N tile
    o_ref[...] = (jnp.dot(xc_ref[...], g_ref[...], preferred_element_type=jnp.float32)
                  + b_ref[...])


# ----------------------------------------------------------------------------------
# Pallas wrappers
# ----------------------------------------------------------------------------------
def _fft_call(x2, Tcat):
    M, S_in = x2.shape
    twoP = Tcat.shape[1]
    return pl.pallas_call(
        _fft_kernel,
        out_shape=jax.ShapeDtypeStruct((M, twoP), jnp.float32),
        grid=(1,),
        in_specs=[pl.BlockSpec((M, S_in), lambda i: (0, 0)),
                  pl.BlockSpec((S_in, twoP), lambda i: (0, 0))],
        out_specs=pl.BlockSpec((M, twoP), lambda i: (0, 0)),
        compiler_params=pltpu.CompilerParams(vmem_limit_bytes=_VMEM_LIMIT),
    )(x2, Tcat)


def _gop_call(k2, Hcat, ntile, gn):
    Mk, n_grid = k2.shape
    n_pad = Hcat.shape[1]                     # == gn * ntile (padded at build time)
    return pl.pallas_call(
        _gop_kernel,
        out_shape=jax.ShapeDtypeStruct((Mk, n_pad), jnp.bfloat16),
        grid=(gn,),
        in_specs=[pl.BlockSpec((Mk, n_grid), lambda i: (0, 0)),
                  pl.BlockSpec((n_grid, ntile), lambda i: (0, i))],
        out_specs=pl.BlockSpec((Mk, ntile), lambda i: (0, i)),
        compiler_params=pltpu.CompilerParams(
            dimension_semantics=("parallel",), vmem_limit_bytes=_VMEM_LIMIT),
    )(k2, Hcat)


def _out_call(xcat, Gmat, bias_row, ntile, gn):
    B, Kf = xcat.shape
    n_pad = Gmat.shape[1]                     # == gn * ntile (padded at trace time)
    return pl.pallas_call(
        _out_kernel,
        out_shape=jax.ShapeDtypeStruct((B, n_pad), jnp.float32),
        grid=(gn,),
        in_specs=[pl.BlockSpec((B, Kf), lambda j: (0, 0)),
                  pl.BlockSpec((Kf, ntile), lambda j: (0, j)),
                  pl.BlockSpec((1, ntile), lambda j: (0, j))],
        out_specs=pl.BlockSpec((B, ntile), lambda j: (0, j)),
        compiler_params=pltpu.CompilerParams(
            dimension_semantics=("parallel",), vmem_limit_bytes=_VMEM_LIMIT),
    )(xcat, Gmat, bias_row)


# ----------------------------------------------------------------------------------
# SO3Conv forward (3 pallas_calls + pure-metadata / tiny XLA glue)
# ----------------------------------------------------------------------------------
def make_so3_conv(nfeature_in, nfeature_out, b_in, b_out, grid):
    consts = build_so3conv_constants(nfeature_in, b_in, b_out, grid)
    P, S_in, S_out, n_grid = consts["P"], consts["S_in"], consts["S_out"], consts["n_grid"]
    twoP = 2 * P
    N_big = twoP * S_out
    N_out = nfeature_out * S_out
    Kf = nfeature_in * twoP

    # build-time, VMEM-budgeted column tiling + zero padding for the dominant Hcat stream
    stream_b = n_grid * 2 + nfeature_in * nfeature_out * 2      # bf16 Hcat col + bf16 Gp col
    resident_b = 2 * nfeature_in * nfeature_out * n_grid * 2 + (1 << 20)
    nt1, gn1, Nbig_pad = _choose_tiles(N_big, stream_b, resident_b)

    Hcat_np = consts["Hcat_np"]
    if Nbig_pad > N_big:
        Hcat_np = np.concatenate(
            [Hcat_np, np.zeros((n_grid, Nbig_pad - N_big), dtype=Hcat_np.dtype)], axis=1)
    Hcat = jnp.asarray(Hcat_np, jnp.bfloat16)           # dominant streamed operand -> bf16
    Tcat = jnp.asarray(consts["Tcat_np"], jnp.float32)  # tiny, keep full precision

    @jax.jit
    def forward(x, kernel, bias):
        B = x.shape[0]
        x2 = x.reshape(B * nfeature_in, S_in).astype(jnp.float32)
        k2 = kernel.reshape(nfeature_in * nfeature_out, n_grid).astype(jnp.bfloat16)

        # kernel 1 (single program, run ONCE): forward SO(3) FFT of x -> Re|Im of xhat
        xc = _fft_call(x2, Tcat)                          # [B*fin, 2P] f32
        xcat = xc.reshape(B, Kf).astype(jnp.bfloat16)     # [B, fin*2P], metadata-only reshape

        # kernel 2: fused (rft x so3_mm-blocks x ifft) weight operator, streamed over N tiles
        Gp = _gop_call(k2, Hcat, nt1, gn1)                # [fin*fout, Nbig_pad] bf16
        if Nbig_pad > N_big:
            Gp = Gp[:, :N_big]

        # glue: [(fi,fo), (p,s)] -> [(fi,p), (fo,s)]  (bf16, small at these band-limits)
        Gmat = Gp.reshape(nfeature_in, nfeature_out, twoP, S_out)
        Gmat = jnp.transpose(Gmat, (0, 2, 1, 3)).reshape(Kf, N_out)

        bias_row = jnp.broadcast_to(
            bias.reshape(nfeature_out, 1).astype(jnp.float32),
            (nfeature_out, S_out)).reshape(1, N_out)

        # trace-time, VMEM-budgeted tiling for the output matmul (batch known here)
        stream_c = Kf * 2 + B * 4 + 4                     # bf16 Gmat col + f32 out col + bias
        resident_c = 2 * B * Kf * 2 + (1 << 20)
        nt2, gn2, Nout_pad = _choose_tiles(N_out, stream_c, resident_c)
        if Nout_pad > N_out:
            Gmat = jnp.pad(Gmat, ((0, 0), (0, Nout_pad - N_out)))
            bias_row = jnp.pad(bias_row, ((0, 0), (0, Nout_pad - N_out)))

        # kernel 3: lane-dense real matmul realizing so3_mm + ifft + bias
        out2 = _out_call(xcat, Gmat, bias_row, nt2, gn2)
        if Nout_pad > N_out:
            out2 = out2[:, :N_out]
        n2 = 2 * b_out
        return out2.reshape(B, nfeature_out, n2, n2, n2)

    return forward, consts


# ----------------------------------------------------------------------------------
# float64 numpy reference with the same transform conventions (per-l, un-fused)
# ----------------------------------------------------------------------------------
def so3conv_reference_np(x, kernel, bias, consts, b_out):
    Tfwd, F, Tinv = consts["Tfwd_np"], consts["F_np"], consts["Tinv_np"]
    scaling = consts["scaling"]
    B, fin = x.shape[0], x.shape[1]
    fout = kernel.shape[1]
    S_in = Tfwd.shape[1]
    xhat = np.einsum("ps,bfs->pbf", Tfwd, x.reshape(B, fin, S_in).astype(np.complex128))
    yhat = np.einsum("fog,gp->pfo", (kernel * scaling).astype(np.complex128), F)
    P = Tfwd.shape[0]
    z = np.zeros((P, B, fout), dtype=np.complex128)
    for l in range(b_out):
        L = 2 * l + 1
        off = so3_index(l, 0, 0)
        xb = xhat[off:off + L * L].reshape(L, L, B, fin)       # [m, n, b, fi]
        yb = yhat[off:off + L * L].reshape(L, L, fin, fout)    # [m', n, fi, fo]
        zb = np.einsum("mnbi,knio->mkbo", np.conj(xb), yb)     # [m, m', b, fo]
        z[off:off + L * L] = zb.reshape(L * L, B, fout)
    out = np.einsum("qbo,qs->bos", z, Tinv).real               # [b, fo, s]
    out = out + bias.reshape(1, fout, 1)
    n2 = 2 * b_out
    return out.reshape(B, fout, n2, n2, n2)


# ----------------------------------------------------------------------------------
if __name__ == "__main__":
    BATCH = 2
    FIN, FOUT = 8, 16
    B_IN, B_OUT = 4, 2
    so3_grid = so3_near_identity_grid()        # 192 SO(3) grid points

    forward, consts = make_so3_conv(FIN, FOUT, B_IN, B_OUT, so3_grid)

    key = jax.random.PRNGKey(0)
    kx, kk, kb = jax.random.split(key, 3)
    x = jax.random.normal(kx, (BATCH, FIN, 2 * B_IN, 2 * B_IN, 2 * B_IN), jnp.float32)
    kernel = jax.random.uniform(kk, (FIN, FOUT, len(so3_grid)), jnp.float32, -1.0, 1.0)
    bias = 0.1 * jax.random.normal(kb, (1, FOUT, 1, 1, 1), jnp.float32)

    out = forward(x, kernel, bias)
    out = jax.block_until_ready(out)

    assert out.shape == (BATCH, FOUT, 2 * B_OUT, 2 * B_OUT, 2 * B_OUT), out.shape
    assert bool(jnp.all(jnp.isfinite(out)))

    # correctness check of the fused bf16 restructuring against the un-fused f64 reference
    ref = so3conv_reference_np(np.asarray(x).astype(np.float64),
                               np.asarray(kernel).astype(np.float64),
                               np.asarray(bias).astype(np.float64).reshape(-1),
                               consts, B_OUT)
    err = float(np.max(np.abs(np.asarray(out).astype(np.float64) - ref))
                / (np.max(np.abs(ref)) + 1e-9))
    assert err < 5e-2, f"max relative error vs reference: {err}"

    print("KERNEL_OK")
</pallas_src>

<mosaic_0001>
module attributes {stable_mosaic.version = 11 : i64} {
  func.func @_gop_kernel(%arg0: i32, %arg1: memref<128x192xbf16, #tpu.memory_space<vmem>>, %arg2: memref<192x1280xbf16, #tpu.memory_space<vmem>>, %arg3: memref<128x1280xbf16, #tpu.memory_space<vmem>>) attributes {dimension_semantics = [#tpu.dimension_semantics<parallel>], iteration_bounds = array<i64: 1>, scalar_prefetch = 0 : i64, scratch_operands = 0 : i64, tpu.core_type = #tpu.core_type<tc>, window_params = [{pipeline_mode = #tpu.pipeline_mode<synchronous>, transform_indices = @transform_0, window_bounds = array<i64: 128, 192>}, {transform_indices = @transform_1, window_bounds = array<i64: 192, 1280>}, {transform_indices = @transform_2, window_bounds = array<i64: 128, 1280>}]} {
    %c0 = arith.constant 0 : index
    %c0_0 = arith.constant 0 : index
    %0 = vector.load %arg1[%c0, %c0_0] : memref<128x192xbf16, #tpu.memory_space<vmem>>, vector<128x192xbf16>
    %c0_1 = arith.constant 0 : index
    %c0_2 = arith.constant 0 : index
    %1 = vector.load %arg2[%c0_1, %c0_2] : memref<192x1280xbf16, #tpu.memory_space<vmem>>, vector<192x1280xbf16>
    %cst = arith.constant dense<0.000000e+00> : vector<128x1280xf32>
    %2 = tpu.matmul %0, %1, %cst {dimension_numbers = #tpu.dot_dimension_numbers<[1], [0], [0], [1], [0, 0, 1, 1], [], []>} : vector<128x192xbf16>, vector<192x1280xbf16>, vector<128x1280xf32> -> vector<128x1280xf32>
    %3 = arith.truncf %2 : vector<128x1280xf32> to vector<128x1280xbf16>
    %c0_3 = arith.constant 0 : index
    %c0_4 = arith.constant 0 : index
    %4 = vector.load %arg3[%c0_3, %c0_4] : memref<128x1280xbf16, #tpu.memory_space<vmem>>, vector<128x1280xbf16>
    tpu.vector_store %arg3[%c0_3, %c0_4], %3 {strides = array<i32>} : memref<128x1280xbf16, #tpu.memory_space<vmem>>, vector<128x1280xbf16>,
    return
  }
  func.func @transform_0(%arg0: i32) -> (i32, i32) {
    %c0_i32 = arith.constant 0 : i32
    %c0_i32_0 = arith.constant 0 : i32
    %c0_i32_1 = arith.constant 0 : i32
    return %c0_i32, %c0_i32_0 : i32, i32
  }
  func.func @transform_1(%arg0: i32) -> (i32, i32) {
    %c0_i32 = arith.constant 0 : i32
    %c0_i32_0 = arith.constant 0 : i32
    return %c0_i32, %arg0 : i32, i32
  }
  func.func @transform_2(%arg0: i32) -> (i32, i32) {
    %c0_i32 = arith.constant 0 : i32
    %c0_i32_0 = arith.constant 0 : i32
    return %c0_i32, %arg0 : i32, i32
  }
}

module attributes {stable_mosaic.version = 11 : i64} {
  func.func @_fft_kernel(%arg0: i32, %arg1: memref<16x512xf32, #tpu.memory_space<vmem>>, %arg2: memref<512x20xf32, #tpu.memory_space<vmem>>, %arg3: memref<16x20xf32, #tpu.memory_space<vmem>>) attributes {dimension_semantics = [#tpu.dimension_semantics<arbitrary>], iteration_bounds = array<i64: 1>, scalar_prefetch = 0 : i64, scratch_operands = 0 : i64, tpu.core_type = #tpu.core_type<tc>, window_params = [{pipeline_mode = #tpu.pipeline_mode<synchronous>, transform_indices = @transform_0, window_bounds = array<i64: 16, 512>}, {pipeline_mode = #tpu.pipeline_mode<synchronous>, transform_indices = @transform_1, window_bounds = array<i64: 512, 20>}, {pipeline_mode = #tpu.pipeline_mode<synchronous>, transform_indices = @transform_2, window_bounds = array<i64: 16, 20>}]} {
    %c0 = arith.constant 0 : index
    %c0_0 = arith.constant 0 : index
    %0 = vector.load %arg1[%c0, %c0_0] : memref<16x512xf32, #tpu.memory_space<vmem>>, vector<16x512xf32>
    %c0_1 = arith.constant 0 : index
    %c0_2 = arith.constant 0 : index
    %1 = vector.load %arg2[%c0_1, %c0_2] : memref<512x20xf32, #tpu.memory_space<vmem>>, vector<512x20xf32>
    %cst = arith.constant dense<0.000000e+00> : vector<16x20xf32>
    %2 = tpu.matmul %0, %1, %cst {dimension_numbers = #tpu.dot_dimension_numbers<[1], [0], [0], [1], [0, 0, 1, 1], [], []>} : vector<16x512xf32>, vector<512x20xf32>, vector<16x20xf32> -> vector<16x20xf32>
    %c0_3 = arith.constant 0 : index
    %c0_4 = arith.constant 0 : index
    %3 = vector.load %arg3[%c0_3, %c0_4] : memref<16x20xf32, #tpu.memory_space<vmem>>, vector<16x20xf32>
    tpu.vector_store %arg3[%c0_3, %c0_4], %2 {strides = array<i32>} : memref<16x20xf32, #tpu.memory_space<vmem>>, vector<16x20xf32>,
    return
  }
  func.func @transform_0(%arg0: i32) -> (i32, i32) {
    %c0_i32 = arith.constant 0 : i32
    %c0_i32_0 = arith.constant 0 : i32
    %c0_i32_1 = arith.constant 0 : i32
    return %c0_i32, %c0_i32_0 : i32, i32
  }
  func.func @transform_1(%arg0: i32) -> (i32, i32) {
    %c0_i32 = arith.constant 0 : i32
    %c0_i32_0 = arith.constant 0 : i32
    %c0_i32_1 = arith.constant 0 : i32
    return %c0_i32, %c0_i32_0 : i32, i32
  }
  func.func @transform_2(%arg0: i32) -> (i32, i32) {
    %c0_i32 = arith.constant 0 : i32
    %c0_i32_0 = arith.constant 0 : i32
    %c0_i32_1 = arith.constant 0 : i32
    return %c0_i32, %c0_i32_0 : i32, i32
  }
}

module attributes {stable_mosaic.version = 11 : i64} {
  func.func @_out_kernel(%arg0: i32, %arg1: memref<2x160xbf16, #tpu.memory_space<vmem>>, %arg2: memref<160x1024xbf16, #tpu.memory_space<vmem>>, %arg3: memref<1x1024xf32, #tpu.memory_space<vmem>>, %arg4: memref<2x1024xf32, #tpu.memory_space<vmem>>) attributes {dimension_semantics = [#tpu.dimension_semantics<parallel>], iteration_bounds = array<i64: 1>, scalar_prefetch = 0 : i64, scratch_operands = 0 : i64, tpu.core_type = #tpu.core_type<tc>, window_params = [{pipeline_mode = #tpu.pipeline_mode<synchronous>, transform_indices = @transform_0, window_bounds = array<i64: 2, 160>}, {transform_indices = @transform_1, window_bounds = array<i64: 160, 1024>}, {transform_indices = @transform_2, window_bounds = array<i64: 1, 1024>}, {transform_indices = @transform_3, window_bounds = array<i64: 2, 1024>}]} {
    %c0 = arith.constant 0 : index
    %c0_0 = arith.constant 0 : index
    %0 = vector.load %arg1[%c0, %c0_0] : memref<2x160xbf16, #tpu.memory_space<vmem>>, vector<2x160xbf16>
    %c0_1 = arith.constant 0 : index
    %c0_2 = arith.constant 0 : index
    %1 = vector.load %arg2[%c0_1, %c0_2] : memref<160x1024xbf16, #tpu.memory_space<vmem>>, vector<160x1024xbf16>
    %cst = arith.constant dense<0.000000e+00> : vector<2x1024xf32>
    %2 = tpu.matmul %0, %1, %cst {dimension_numbers = #tpu.dot_dimension_numbers<[1], [0], [0], [1], [0, 0, 1, 1], [], []>} : vector<2x160xbf16>, vector<160x1024xbf16>, vector<2x1024xf32> -> vector<2x1024xf32>
    %c0_3 = arith.constant 0 : index
    %c0_4 = arith.constant 0 : index
    %3 = vector.load %arg3[%c0_3, %c0_4] : memref<1x1024xf32, #tpu.memory_space<vmem>>, vector<1x1024xf32>
    %4 = vector.broadcast %3 : vector<1x1024xf32> to vector<2x1024xf32>
    %5 = arith.addf %2, %4 : vector<2x1024xf32>
    %c0_5 = arith.constant 0 : index
    %c0_6 = arith.constant 0 : index
    %6 = vector.load %arg4[%c0_5, %c0_6] : memref<2x1024xf32, #tpu.memory_space<vmem>>, vector<2x1024xf32>
    tpu.vector_store %arg4[%c0_5, %c0_6], %5 {strides = array<i32>} : memref<2x1024xf32, #tpu.memory_space<vmem>>, vector<2x1024xf32>,
    return
  }
  func.func @transform_0(%arg0: i32) -> (i32, i32) {
    %c0_i32 = arith.constant 0 : i32
    %c0_i32_0 = arith.constant 0 : i32
    %c0_i32_1 = arith.constant 0 : i32
    return %c0_i32, %c0_i32_0 : i32, i32
  }
  func.func @transform_1(%arg0: i32) -> (i32, i32) {
    %c0_i32 = arith.constant 0 : i32
    %c0_i32_0 = arith.constant 0 : i32
    return %c0_i32, %arg0 : i32, i32
  }
  func.func @transform_2(%arg0: i32) -> (i32, i32) {
    %c0_i32 = arith.constant 0 : i32
    %c0_i32_0 = arith.constant 0 : i32
    return %c0_i32, %arg0 : i32, i32
  }
  func.func @transform_3(%arg0: i32) -> (i32, i32) {
    %c0_i32 = arith.constant 0 : i32
    %c0_i32_0 = arith.constant 0 : i32
    return %c0_i32, %arg0 : i32, i32
  }
}

</mosaic_0001>

<llo_original>
// kernel: forward.4
$region0: #{forward.4}
  #allocation0 [shape = 'u32[]', space=smem, size = 0x4, offset = 0x4, fixed_abs, tag = 'smem constant byte address 0x4 - core index']
  #allocation1 [shape = 'u32[144,128]{1,0:T(1,128)}', space=vmem, size = 0x12000, scoped, tag = 'internal scratch']
  %s0 = inlined_call_operand.vmem [shape: bf16[128,192], index: 0, kind: input, shape index: {}]
  %s1 = inlined_call_operand.vmem [shape: bf16[192,1280], index: 1, kind: input, shape index: {}]
  %s2 = inlined_call_operand.vmem [shape: bf16[128,1280], index: 2, kind: output, shape index: {}]
  %s3 = sld [smem:[#allocation0]]
  $region18: #{forward.4} parent=0
    _
  %s5 = ssub.s32 1, %s3
  %s6 = scalar_select 0, %s5, %s3
  // Predicated region
  $region2: #{forward.4} parent=0 // pred_check
    _
  $region3: #{forward.4} parent=0 // pred_check_branch
    %8 = sbr.rel (0) target = $region5
  $region4: #{forward.4} parent=0 // pred_region
    _
  $region5: #{forward.4} parent=0 // pred_fallthru
    _
  // Predicated region
  $region6: #{forward.4} parent=0 // pred_check
    _
  $region7: #{forward.4} parent=0 // pred_check_branch
    %10 = sbr.rel (0) target = $region9
  $region8: #{forward.4} parent=0 // pred_region
    _
  $region9: #{forward.4} parent=0 // pred_fallthru
    _
  %v12 = vld [vmem:[%s0] sm:$0xff]
  %v13 = vld [vmem:[%s0 + $0x8] sm:$0xff]
  %v14 = vld [vmem:[%s0 + $0x10] sm:$0xff]
  %v15 = vld [vmem:[%s0 + $0x18] sm:$0xff]
  %v16 = vld [vmem:[%s0 + $0x20] sm:$0xff]
  %v17 = vld [vmem:[%s0 + $0x28] sm:$0xff]
  %v18 = vld [vmem:[%s0 + $0x30] sm:$0xff]
  %v19 = vld [vmem:[%s0 + $0x38] sm:$0xff]
  %v20 = vld [vmem:[%s0 + $0x40] sm:$0xff]
  %v21 = vld [vmem:[%s0 + $0x48] sm:$0xff]
  %v22 = vld [vmem:[%s0 + $0x50] sm:$0xff]
  %v23 = vld [vmem:[%s0 + $0x58] sm:$0xff]
  %v24 = vld [vmem:[%s0 + $0x60] sm:$0xff]
  %v25 = vld [vmem:[%s0 + $0x68] sm:$0xff]
  %v26 = vld [vmem:[%s0 + $0x70] sm:$0xff]
  %v27 = vld [vmem:[%s0 + $0x78] sm:$0xff]
  %v28 = vld [vmem:[%s1] sm:$0xff]
  %v29 = vld [vmem:[%s1 + $0x8] sm:$0xff]
  %v30 = vld [vmem:[%s1 + $0x10] sm:$0xff]
  %v31 = vld [vmem:[%s1 + $0x18] sm:$0xff]
  %v32 = vld [vmem:[%s1 + $0x20] sm:$0xff]
  %v33 = vld [vmem:[%s1 + $0x28] sm:$0xff]
  %v34 = vld [vmem:[%s1 + $0x30] sm:$0xff]
  %v35 = vld [vmem:[%s1 + $0x38] sm:$0xff]
  %v36 = vld [vmem:[%s1 + $0x40] sm:$0xff]
  %v37 = vld [vmem:[%s1 + $0x48] sm:$0xff]
  %v38 = vld [vmem:[%s1 + $0x50] sm:$0xff]
  %v39 = vld [vmem:[%s1 + $0x58] sm:$0xff]
  %v40 = vld [vmem:[%s1 + $0x60] sm:$0xff]
  %v41 = vld [vmem:[%s1 + $0x68] sm:$0xff]
  %v42 = vld [vmem:[%s1 + $0x70] sm:$0xff]
  %v43 = vld [vmem:[%s1 + $0x78] sm:$0xff]
  %v44 = vld [vmem:[%s1 + $0x80] sm:$0xff]
  %v45 = vld [vmem:[%s1 + $0x88] sm:$0xff]
  %v46 = vld [vmem:[%s1 + $0x90] sm:$0xff]
  %v47 = vld [vmem:[%s1 + $0x98] sm:$0xff]
  %v48 = vld [vmem:[%s1 + $0xa0] sm:$0xff]
  %v49 = vld [vmem:[%s1 + $0xa8] sm:$0xff]
  %v50 = vld [vmem:[%s1 + $0xb0] sm:$0xff]
  %v51 = vld [vmem:[%s1 + $0xb8] sm:$0xff]
  %v52 = vld [vmem:[%s1 + $0xc0] sm:$0xff]
  %v53 = vld [vmem:[%s1 + $0xc8] sm:$0xff]
  %v54 = vld [vmem:[%s1 + $0xd0] sm:$0xff]
  %v55 = vld [vmem:[%s1 + $0xd8] sm:$0xff]
  %v56 = vld [vmem:[%s1 + $0xe0] sm:$0xff]
  %v57 = vld [vmem:[%s1 + $0xe8] sm:$0xff]
  %v58 = vld [vmem:[%s1 + $0xf0] sm:$0xff]
  %v59 = vld [vmem:[%s1 + $0xf8] sm:$0xff]
  %v60 = vld [vmem:[%s1 + $0x100] sm:$0xff]
  %v61 = vld [vmem:[%s1 + $0x108] sm:$0xff]
  %v62 = vld [vmem:[%s1 + $0x110] sm:$0xff]
  %v63 = vld [vmem:[%s1 + $0x118] sm:$0xff]
  %v64 = vld [vmem:[%s1 + $0x120] sm:$0xff]
  %v65 = vld [vmem:[%s1 + $0x128] sm:$0xff]
  %v66 = vld [vmem:[%s1 + $0x130] sm:$0xff]
  %v67 = vld [vmem:[%s1 + $0x138] sm:$0xff]
  %v68 = vld [vmem:[%s1 + $0x140] sm:$0xff]
  %v69 = vld [vmem:[%s1 + $0x148] sm:$0xff]
  %v70 = vld [vmem:[%s1 + $0x150] sm:$0xff]
  %v71 = vld [vmem:[%s1 + $0x158] sm:$0xff]
  %v72 = vld [vmem:[%s1 + $0x160] sm:$0xff]
  %v73 = vld [vmem:[%s1 + $0x168] sm:$0xff]
  %v74 = vld [vmem:[%s1 + $0x170] sm:$0xff]
  %v75 = vld [vmem:[%s1 + $0x178] sm:$0xff]
  %v76 = vld [vmem:[%s1 + $0x180] sm:$0xff]
  %v77 = vld [vmem:[%s1 + $0x188] sm:$0xff]
  %v78 = vld [vmem:[%s1 + $0x190] sm:$0xff]
  %v79 = vld [vmem:[%s1 + $0x198] sm:$0xff]
  %v80 = vld [vmem:[%s1 + $0x1a0] sm:$0xff]
  %v81 = vld [vmem:[%s1 + $0x1a8] sm:$0xff]
  %v82 = vld [vmem:[%s1 + $0x1b0] sm:$0xff]
  %v83 = vld [vmem:[%s1 + $0x1b8] sm:$0xff]
  %v84 = vld [vmem:[%s1 + $0x1c0] sm:$0xff]
  %v85 = vld [vmem:[%s1 + $0x1c8] sm:$0xff]
  %v86 = vld [vmem:[%s1 + $0x1d0] sm:$0xff]
  %v87 = vld [vmem:[%s1 + $0x1d8] sm:$0xff]
  %v88 = vld [vmem:[%s1 + $0x1e0] sm:$0xff]
  %v89 = vld [vmem:[%s1 + $0x1e8] sm:$0xff]
  %v90 = vld [vmem:[%s1 + $0x1f0] sm:$0xff]
  %v91 = vld [vmem:[%s1 + $0x1f8] sm:$0xff]
  %v92 = vld [vmem:[%s1 + $0x200] sm:$0xff]
  %v93 = vld [vmem:[%s1 + $0x208] sm:$0xff]
  %v94 = vld [vmem:[%s1 + $0x210] sm:$0xff]
  %v95 = vld [vmem:[%s1 + $0x218] sm:$0xff]
  %v96 = vld [vmem:[%s1 + $0x220] sm:$0xff]
  %v97 = vld [vmem:[%s1 + $0x228] sm:$0xff]
  %v98 = vld [vmem:[%s1 + $0x230] sm:$0xff]
  %v99 = vld [vmem:[%s1 + $0x238] sm:$0xff]
  %v100 = vld [vmem:[%s1 + $0x240] sm:$0xff]
  %v101 = vld [vmem:[%s1 + $0x248] sm:$0xff]
  %v102 = vld [vmem:[%s1 + $0x250] sm:$0xff]
  %v103 = vld [vmem:[%s1 + $0x258] sm:$0xff]
  %v104 = vld [vmem:[%s1 + $0x260] sm:$0xff]
  %v105 = vld [vmem:[%s1 + $0x268] sm:$0xff]
  %v106 = vld [vmem:[%s1 + $0x270] sm:$0xff]
  %v107 = vld [vmem:[%s1 + $0x278] sm:$0xff]
  %v108 = vld [vmem:[%s1 + $0x280] sm:$0xff]
  %v109 = vld [vmem:[%s1 + $0x288] sm:$0xff]
  %v110 = vld [vmem:[%s1 + $0x290] sm:$0xff]
  %v111 = vld [vmem:[%s1 + $0x298] sm:$0xff]
  %v112 = vld [vmem:[%s1 + $0x2a0] sm:$0xff]
  %v113 = vld [vmem:[%s1 + $0x2a8] sm:$0xff]
  %v114 = vld [vmem:[%s1 + $0x2b0] sm:$0xff]
  %v115 = vld [vmem:[%s1 + $0x2b8] sm:$0xff]
  %v116 = vld [vmem:[%s1 + $0x2c0] sm:$0xff]
  %v117 = vld [vmem:[%s1 + $0x2c8] sm:$0xff]
  %v118 = vld [vmem:[%s1 + $0x2d0] sm:$0xff]
  %v119 = vld [vmem:[%s1 + $0x2d8] sm:$0xff]
  %v120 = vld [vmem:[%s1 + $0x2e0] sm:$0xff]
  %v121 = vld [vmem:[%s1 + $0x2e8] sm:$0xff]
  %v122 = vld [vmem:[%s1 + $0x2f0] sm:$0xff]
  %v123 = vld [vmem:[%s1 + $0x2f8] sm:$0xff]
  %v124 = vld [vmem:[%s1 + $0x300] sm:$0xff]
  %v125 = vld [vmem:[%s1 + $0x308] sm:$0xff]
  %v126 = vld [vmem:[%s1 + $0x310] sm:$0xff]
  %v127 = vld [vmem:[%s1 + $0x318] sm:$0xff]
  %v128 = vld [vmem:[%s1 + $0x320] sm:$0xff]
  %v129 = vld [vmem:[%s1 + $0x328] sm:$0xff]
  %v130 = vld [vmem:[%s1 + $0x330] sm:$0xff]
  %v131 = vld [vmem:[%s1 + $0x338] sm:$0xff]
  %v132 = vld [vmem:[%s1 + $0x340] sm:$0xff]
  %v133 = vld [vmem:[%s1 + $0x348] sm:$0xff]
  %v134 = vld [vmem:[%s1 + $0x350] sm:$0xff]
  %v135 = vld [vmem:[%s1 + $0x358] sm:$0xff]
  %v136 = vld [vmem:[%s1 + $0x360] sm:$0xff]
  %v137 = vld [vmem:[%s1 + $0x368] sm:$0xff]
  %v138 = vld [vmem:[%s1 + $0x370] sm:$0xff]
  %v139 = vld [vmem:[%s1 + $0x378] sm:$0xff]
  %v140 = vld [vmem:[%s1 + $0x380] sm:$0xff]
  %v141 = vld [vmem:[%s1 + $0x388] sm:$0xff]
  %v142 = vld [vmem:[%s1 + $0x390] sm:$0xff]
  %v143 = vld [vmem:[%s1 + $0x398] sm:$0xff]
  %v144 = vld [vmem:[%s1 + $0x3a0] sm:$0xff]
  %v145 = vld [vmem:[%s1 + $0x3a8] sm:$0xff]
  %v146 = vld [vmem:[%s1 + $0x3b0] sm:$0xff]
  %v147 = vld [vmem:[%s1 + $0x3b8] sm:$0xff]
  %v164 = vunpack.c.l.b16 %v12
  %v165 = vunpack.c.h.b16 %v12
  %v166 = vunpack.c.l.b16 %v13
  %v167 = vunpack.c.h.b16 %v13
  %v168 = vunpack.c.l.b16 %v14
  %v169 = vunpack.c.h.b16 %v14
  %v170 = vunpack.c.l.b16 %v15
  %v171 = vunpack.c.h.b16 %v15
  %v172 = vunpack.c.l.b16 %v16
  %v173 = vunpack.c.h.b16 %v16
  %v174 = vunpack.c.l.b16 %v17
  %v175 = vunpack.c.h.b16 %v17
  %v176 = vunpack.c.l.b16 %v18
  %v177 = vunpack.c.h.b16 %v18
  %v178 = vunpack.c.l.b16 %v19
  %v179 = vunpack.c.h.b16 %v19
  %v180 = vunpack.c.l.b16 %v20
  %v181 = vunpack.c.h.b16 %v20
  %v182 = vunpack.c.l.b16 %v21
  %v183 = vunpack.c.h.b16 %v21
  %v184 = vunpack.c.l.b16 %v22
  %v185 = vunpack.c.h.b16 %v22
  %v186 = vunpack.c.l.b16 %v23
  %v187 = vunpack.c.h.b16 %v23
  %v188 = vunpack.c.l.b16 %v24
  %v189 = vunpack.c.h.b16 %v24
  %v190 = vunpack.c.l.b16 %v25
  %v191 = vunpack.c.h.b16 %v25
  %v192 = vunpack.c.l.b16 %v26
  %v193 = vunpack.c.h.b16 %v26
  %v194 = vunpack.c.l.b16 %v27
  %v195 = vunpack.c.h.b16 %v27
  %v196 = vpack.c.b16 %v166, %v164
  %v197 = vpack.c.b16 %v167, %v165
  %v198 = vpack.c.b16 %v170, %v168
  %v199 = vpack.c.b16 %v171, %v169
  %v200 = vpack.c.b16 %v174, %v172
  %v201 = vpack.c.b16 %v175, %v173
  %v202 = vpack.c.b16 %v178, %v176
  %v203 = vpack.c.b16 %v179, %v177
  %v204 = vpack.c.b16 %v182, %v180
  %v205 = vpack.c.b16 %v183, %v181
  %v206 = vpack.c.b16 %v186, %v184
  %v207 = vpack.c.b16 %v187, %v185
  %v208 = vpack.c.b16 %v190, %v188
  %v209 = vpack.c.b16 %v191, %v189
  %v210 = vpack.c.b16 %v194, %v192
  %v211 = vpack.c.b16 %v195, %v193
  %v340 = vunpack.c.l.b16 %v28
  %v341 = vunpack.c.h.b16 %v28
  %v342 = vunpack.c.l.b16 %v29
  %v343 = vunpack.c.h.b16 %v29
  %v344 = vunpack.c.l.b16 %v30
  %v345 = vunpack.c.h.b16 %v30
  %v346 = vunpack.c.l.b16 %v31
  %v347 = vunpack.c.h.b16 %v31
  %v348 = vunpack.c.l.b16 %v32
  %v349 = vunpack.c.h.b16 %v32
  %v350 = vunpack.c.l.b16 %v33
  %v351 = vunpack.c.h.b16 %v33
  %v352 = vunpack.c.l.b16 %v34
  %v353 = vunpack.c.h.b16 %v34
  %v354 = vunpack.c.l.b16 %v35
  %v355 = vunpack.c.h.b16 %v35
  %v356 = vunpack.c.l.b16 %v36
  %v357 = vunpack.c.h.b16 %v36
  %v358 = vunpack.c.l.b16 %v37
  %v359 = vunpack.c.h.b16 %v37
  %v360 = vunpack.c.l.b16 %v38
  %v361 = vunpack.c.h.b16 %v38
  %v362 = vunpack.c.l.b16 %v39
  %v363 = vunpack.c.h.b16 %v39
  %v364 = vunpack.c.l.b16 %v40
  %v365 = vunpack.c.h.b16 %v40
  %v366 = vunpack.c.l.b16 %v41
  %v367 = vunpack.c.h.b16 %v41
  %v368 = vunpack.c.l.b16 %v42
  %v369 = vunpack.c.h.b16 %v42
  %v370 = vunpack.c.l.b16 %v43
  %v371 = vunpack.c.h.b16 %v43
  %v372 = vunpack.c.l.b16 %v44
  %v373 = vunpack.c.h.b16 %v44
  %v374 = vunpack.c.l.b16 %v45
  %v375 = vunpack.c.h.b16 %v45
  %v376 = vunpack.c.l.b16 %v46
  %v377 = vunpack.c.h.b16 %v46
  %v378 = vunpack.c.l.b16 %v47
  %v379 = vunpack.c.h.b16 %v47
  %v380 = vunpack.c.l.b16 %v48
  %v381 = vunpack.c.h.b16 %v48
  %v382 = vunpack.c.l.b16 %v49
  %v383 = vunpack.c.h.b16 %v49
  %v384 = vunpack.c.l.b16 %v50
  %v385 = vunpack.c.h.b16 %v50
  %v386 = vunpack.c.l.b16 %v51
  %v387 = vunpack.c.h.b16 %v51
  %v388 = vunpack.c.l.b16 %v52
  %v389 = vunpack.c.h.b16 %v52
  %v390 = vunpack.c.l.b16 %v53
  %v391 = vunpack.c.h.b16 %v53
  %v392 = vunpack.c.l.b16 %v54
  %v393 = vunpack.c.h.b16 %v54
  %v394 = vunpack.c.l.b16 %v55
  %v395 = vunpack.c.h.b16 %v55
  %v396 = vunpack.c.l.b16 %v56
  %v397 = vunpack.c.h.b16 %v56
  %v398 = vunpack.c.l.b16 %v57
  %v399 = vunpack.c.h.b16 %v57
  %v400 = vunpack.c.l.b16 %v58
  %v401 = vunpack.c.h.b16 %v58
  %v402 = vunpack.c.l.b16 %v59
  %v403 = vunpack.c.h.b16 %v59
  %v404 = vunpack.c.l.b16 %v60
  %v405 = vunpack.c.h.b16 %v60
  %v406 = vunpack.c.l.b16 %v61
  %v407 = vunpack.c.h.b16 %v61
  %v408 = vunpack.c.l.b16 %v62
  %v409 = vunpack.c.h.b16 %v62
  %v410 = vunpack.c.l.b16 %v63
  %v411 = vunpack.c.h.b16 %v63
  %v412 = vunpack.c.l.b16 %v64
  %v413 = vunpack.c.h.b16 %v64
  %v414 = vunpack.c.l.b16 %v65
  %v415 = vunpack.c.h.b16 %v65
  %v416 = vunpack.c.l.b16 %v66
  %v417 = vunpack.c.h.b16 %v66
  %v418 = vunpack.c.l.b16 %v67
  %v419 = vunpack.c.h.b16 %v67
  %v420 = vunpack.c.l.b16 %v68
  %v421 = vunpack.c.h.b16 %v68
  %v422 = vunpack.c.l.b16 %v69
  %v423 = vunpack.c.h.b16 %v69
  %v424 = vunpack.c.l.b16 %v70
  %v425 = vunpack.c.h.b16 %v70
  %v426 = vunpack.c.l.b16 %v71
  %v427 = vunpack.c.h.b16 %v71
  %v428 = vunpack.c.l.b16 %v72
  %v429 = vunpack.c.h.b16 %v72
  %v430 = vunpack.c.l.b16 %v73
  %v431 = vunpack.c.h.b16 %v73
  %v432 = vunpack.c.l.b16 %v74
  %v433 = vunpack.c.h.b16 %v74
  %v434 = vunpack.c.l.b16 %v75
  %v435 = vunpack.c.h.b16 %v75
  %v436 = vunpack.c.l.b16 %v76
  %v437 = vunpack.c.h.b16 %v76
  %v438 = vunpack.c.l.b16 %v77
  %v439 = vunpack.c.h.b16 %v77
  %v440 = vunpack.c.l.b16 %v78
  %v441 = vunpack.c.h.b16 %v78
  %v442 = vunpack.c.l.b16 %v79
  %v443 = vunpack.c.h.b16 %v79
  %v444 = vunpack.c.l.b16 %v80
  %v445 = vunpack.c.h.b16 %v80
  %v446 = vunpack.c.l.b16 %v81
  %v447 = vunpack.c.h.b16 %v81
  %v448 = vunpack.c.l.b16 %v82
  %v449 = vunpack.c.h.b16 %v82
  %v450 = vunpack.c.l.b16 %v83
  %v451 = vunpack.c.h.b16 %v83
  %v452 = vunpack.c.l.b16 %v84
  %v453 = vunpack.c.h.b16 %v84
  %v454 = vunpack.c.l.b16 %v85
  %v455 = vunpack.c.h.b16 %v85
  %v456 = vunpack.c.l.b16 %v86
  %v457 = vunpack.c.h.b16 %v86
  %v458 = vunpack.c.l.b16 %v87
  %v459 = vunpack.c.h.b16 %v87
  %v460 = vunpack.c.l.b16 %v88
  %v461 = vunpack.c.h.b16 %v88
  %v462 = vunpack.c.l.b16 %v89
  %v463 = vunpack.c.h.b16 %v89
  %v464 = vunpack.c.l.b16 %v90
  %v465 = vunpack.c.h.b16 %v90
  %v466 = vunpack.c.l.b16 %v91
  %v467 = vunpack.c.h.b16 %v91
  %v468 = vunpack.c.l.b16 %v92
  %v469 = vunpack.c.h.b16 %v92
  %v470 = vunpack.c.l.b16 %v93
  %v471 = vunpack.c.h.b16 %v93
  %v472 = vunpack.c.l.b16 %v94
  %v473 = vunpack.c.h.b16 %v94
  %v474 = vunpack.c.l.b16 %v95
  %v475 = vunpack.c.h.b16 %v95
  %v476 = vunpack.c.l.b16 %v96
  %v477 = vunpack.c.h.b16 %v96
  %v478 = vunpack.c.l.b16 %v97
  %v479 = vunpack.c.h.b16 %v97
  %v480 = vunpack.c.l.b16 %v98
  %v481 = vunpack.c.h.b16 %v98
  %v482 = vunpack.c.l.b16 %v99
  %v483 = vunpack.c.h.b16 %v99
  %v484 = vunpack.c.l.b16 %v100
  %v485 = vunpack.c.h.b16 %v100
  %v486 = vunpack.c.l.b16 %v101
  %v487 = vunpack.c.h.b16 %v101
  %v488 = vunpack.c.l.b16 %v102
  %v489 = vunpack.c.h.b16 %v102
  %v490 = vunpack.c.l.b16 %v103
  %v491 = vunpack.c.h.b16 %v103
  %v492 = vunpack.c.l.b16 %v104
  %v493 = vunpack.c.h.b16 %v104
  %v494 = vunpack.c.l.b16 %v105
  %v495 = vunpack.c.h.b16 %v105
  %v496 = vunpack.c.l.b16 %v106
  %v497 = vunpack.c.h.b16 %v106
  %v498 = vunpack.c.l.b16 %v107
  %v499 = vunpack.c.h.b16 %v107
  %v500 = vunpack.c.l.b16 %v108
  %v501 = vunpack.c.h.b16 %v108
  %v502 = vunpack.c.l.b16 %v109
  %v503 = vunpack.c.h.b16 %v109
  %v504 = vunpack.c.l.b16 %v110
  %v505 = vunpack.c.h.b16 %v110
  %v506 = vunpack.c.l.b16 %v111
  %v507 = vunpack.c.h.b16 %v111
  %v508 = vunpack.c.l.b16 %v112
  %v509 = vunpack.c.h.b16 %v112
  %v510 = vunpack.c.l.b16 %v113
  %v511 = vunpack.c.h.b16 %v113
  %v512 = vunpack.c.l.b16 %v114
  %v513 = vunpack.c.h.b16 %v114
  %v514 = vunpack.c.l.b16 %v115
  %v515 = vunpack.c.h.b16 %v115
  %v516 = vunpack.c.l.b16 %v116
  %v517 = vunpack.c.h.b16 %v116
  %v518 = vunpack.c.l.b16 %v117
  %v519 = vunpack.c.h.b16 %v117
  %v520 = vunpack.c.l.b16 %v118
  %v521 = vunpack.c.h.b16 %v118
  %v522 = vunpack.c.l.b16 %v119
  %v523 = vunpack.c.h.b16 %v119
  %v524 = vunpack.c.l.b16 %v120
  %v525 = vunpack.c.h.b16 %v120
  %v526 = vunpack.c.l.b16 %v121
  %v527 = vunpack.c.h.b16 %v121
  %v528 = vunpack.c.l.b16 %v122
  %v529 = vunpack.c.h.b16 %v122
  %v530 = vunpack.c.l.b16 %v123
  %v531 = vunpack.c.h.b16 %v123
  %v532 = vunpack.c.l.b16 %v124
  %v533 = vunpack.c.h.b16 %v124
  %v534 = vunpack.c.l.b16 %v125
  %v535 = vunpack.c.h.b16 %v125
  %v536 = vunpack.c.l.b16 %v126
  %v537 = vunpack.c.h.b16 %v126
  %v538 = vunpack.c.l.b16 %v127
  %v539 = vunpack.c.h.b16 %v127
  %v540 = vunpack.c.l.b16 %v128
  %v541 = vunpack.c.h.b16 %v128
  %v542 = vunpack.c.l.b16 %v129
  %v543 = vunpack.c.h.b16 %v129
  %v544 = vunpack.c.l.b16 %v130
  %v545 = vunpack.c.h.b16 %v130
  %v546 = vunpack.c.l.b16 %v131
  %v547 = vunpack.c.h.b16 %v131
  %v548 = vunpack.c.l.b16 %v132
  %v549 = vunpack.c.h.b16 %v132
  %v550 = vunpack.c.l.b16 %v133
  %v551 = vunpack.c.h.b16 %v133
  %v552 = vunpack.c.l.b16 %v134
  %v553 = vunpack.c.h.b16 %v134
  %v554 = vunpack.c.l.b16 %v135
  %v555 = vunpack.c.h.b16 %v135
  %v556 = vunpack.c.l.b16 %v136
  %v557 = vunpack.c.h.b16 %v136
  %v558 = vunpack.c.l.b16 %v137
  %v559 = vunpack.c.h.b16 %v137
  %v560 = vunpack.c.l.b16 %v138
  %v561 = vunpack.c.h.b16 %v138
  %v562 = vunpack.c.l.b16 %v139
  %v563 = vunpack.c.h.b16 %v139
  %v564 = vunpack.c.l.b16 %v140
  %v565 = vunpack.c.h.b16 %v140
  %v566 = vunpack.c.l.b16 %v141
  %v567 = vunpack.c.h.b16 %v141
  %v568 = vunpack.c.l.b16 %v142
  %v569 = vunpack.c.h.b16 %v142
  %v570 = vunpack.c.l.b16 %v143
  %v571 = vunpack.c.h.b16 %v143
  %v572 = vunpack.c.l.b16 %v144
  %v573 = vunpack.c.h.b16 %v144
  %v574 = vunpack.c.l.b16 %v145
  %v575 = vunpack.c.h.b16 %v145
  %v576 = vunpack.c.l.b16 %v146
  %v577 = vunpack.c.h.b16 %v146
  %v578 = vunpack.c.l.b16 %v147
  %v579 = vunpack.c.h.b16 %v147
  %v580 = vpack.c.b16 %v350, %v340
  %v581 = vpack.c.b16 %v351, %v341
  %v582 = vpack.c.b16 %v352, %v342
  %v583 = vpack.c.b16 %v353, %v343
  %v584 = vpack.c.b16 %v354, %v344
  %v585 = vpack.c.b16 %v355, %v345
  %v586 = vpack.c.b16 %v356, %v346
  %v587 = vpack.c.b16 %v357, %v347
  %v588 = vpack.c.b16 %v358, %v348
  %v589 = vpack.c.b16 %v359, %v349
  %v590 = vpack.c.b16 %v370, %v360
  %v591 = vpack.c.b16 %v371, %v361
  %v592 = vpack.c.b16 %v372, %v362
  %v593 = vpack.c.b16 %v373, %v363
  %v594 = vpack.c.b16 %v374, %v364
  %v595 = vpack.c.b16 %v375, %v365
  %v596 = vpack.c.b16 %v376, %v366
  %v597 = vpack.c.b16 %v377, %v367
  %v598 = vpack.c.b16 %v378, %v368
  %v599 = vpack.c.b16 %v379, %v369
  %v600 = vpack.c.b16 %v390, %v380
  %v601 = vpack.c.b16 %v391, %v381
  %v602 = vpack.c.b16 %v392, %v382
  %v603 = vpack.c.b16 %v393, %v383
  %v604 = vpack.c.b16 %v394, %v384
  %v605 = vpack.c.b16 %v395, %v385
  %v606 = vpack.c.b16 %v396, %v386
  %v607 = vpack.c.b16 %v397, %v387
  %v608 = vpack.c.b16 %v398, %v388
  %v609 = vpack.c.b16 %v399, %v389
  %v610 = vpack.c.b16 %v410, %v400
  %v611 = vpack.c.b16 %v411, %v401
  %v612 = vpack.c.b16 %v412, %v402
  %v613 = vpack.c.b16 %v413, %v403
  %v614 = vpack.c.b16 %v414, %v404
  %v615 = vpack.c.b16 %v415, %v405
  %v616 = vpack.c.b16 %v416, %v406
  %v617 = vpack.c.b16 %v417, %v407
  %v618 = vpack.c.b16 %v418, %v408
  %v619 = vpack.c.b16 %v419, %v409
  %v620 = vpack.c.b16 %v430, %v420
  %v621 = vpack.c.b16 %v431, %v421
  %v622 = vpack.c.b16 %v432, %v422
  %v623 = vpack.c.b16 %v433, %v423
  %v624 = vpack.c.b16 %v434, %v424
  %v625 = vpack.c.b16 %v435, %v425
  %v626 = vpack.c.b16 %v436, %v426
  %v627 = vpack.c.b16 %v437, %v427
  %v628 = vpack.c.b16 %v438, %v428
  %v629 = vpack.c.b16 %v439, %v429
  %v630 = vpack.c.b16 %v450, %v440
  %v631 = vpack.c.b16 %v451, %v441
  %v632 = vpack.c.b16 %v452, %v442
  %v633 = vpack.c.b16 %v453, %v443
  %v634 = vpack.c.b16 %v454, %v444
  %v635 = vpack.c.b16 %v455, %v445
  %v636 = vpack.c.b16 %v456, %v446
  %v637 = vpack.c.b16 %v457, %v447
  %v638 = vpack.c.b16 %v458, %v448
  %v639 = vpack.c.b16 %v459, %v449
  %v640 = vpack.c.b16 %v470, %v460
  %v641 = vpack.c.b16 %v471, %v461
  %v642 = vpack.c.b16 %v472, %v462
  %v643 = vpack.c.b16 %v473, %v463
  %v644 = vpack.c.b16 %v474, %v464
  %v645 = vpack.c.b16 %v475, %v465
  %v646 = vpack.c.b16 %v476, %v466
  %v647 = vpack.c.b16 %v477, %v467
  %v648 = vpack.c.b16 %v478, %v468
  %v649 = vpack.c.b16 %v479, %v469
  %v650 = vpack.c.b16 %v490, %v480
  %v651 = vpack.c.b16 %v491, %v481
  %v652 = vpack.c.b16 %v492, %v482
  %v653 = vpack.c.b16 %v493, %v483
  %v654 = vpack.c.b16 %v494, %v484
  %v655 = vpack.c.b16 %v495, %v485
  %v656 = vpack.c.b16 %v496, %v486
  %v657 = vpack.c.b16 %v497, %v487
  %v658 = vpack.c.b16 %v498, %v488
  %v659 = vpack.c.b16 %v499, %v489
  %v660 = vpack.c.b16 %v510, %v500
  %v661 = vpack.c.b16 %v511, %v501
  %v662 = vpack.c.b16 %v512, %v502
  %v663 = vpack.c.b16 %v513, %v503
  %v664 = vpack.c.b16 %v514, %v504
  %v665 = vpack.c.b16 %v515, %v505
  %v666 = vpack.c.b16 %v516, %v506
  %v667 = vpack.c.b16 %v517, %v507
  %v668 = vpack.c.b16 %v518, %v508
  %v669 = vpack.c.b16 %v519, %v509
  %v670 = vpack.c.b16 %v530, %v520
  %v671 = vpack.c.b16 %v531, %v521
  %v672 = vpack.c.b16 %v532, %v522
  %v673 = vpack.c.b16 %v533, %v523
  %v674 = vpack.c.b16 %v534, %v524
  %v675 = vpack.c.b16 %v535, %v525
  %v676 = vpack.c.b16 %v536, %v526
  %v677 = vpack.c.b16 %v537, %v527
  %v678 = vpack.c.b16 %v538, %v528
  %v679 = vpack.c.b16 %v539, %v529
  %v680 = vpack.c.b16 %v550, %v540
  %v681 = vpack.c.b16 %v551, %v541
  %v682 = vpack.c.b16 %v552, %v542
  %v683 = vpack.c.b16 %v553, %v543
  %v684 = vpack.c.b16 %v554, %v544
  %v685 = vpack.c.b16 %v555, %v545
  %v686 = vpack.c.b16 %v556, %v546
  %v687 = vpack.c.b16 %v557, %v547
  %v688 = vpack.c.b16 %v558, %v548
  %v689 = vpack.c.b16 %v559, %v549
  %v690 = vpack.c.b16 %v570, %v560
  %v691 = vpack.c.b16 %v571, %v561
  %v692 = vpack.c.b16 %v572, %v562
  %v693 = vpack.c.b16 %v573, %v563
  %v694 = vpack.c.b16 %v574, %v564
  %v695 = vpack.c.b16 %v575, %v565
  %v696 = vpack.c.b16 %v576, %v566
  %v697 = vpack.c.b16 %v577, %v567
  %v698 = vpack.c.b16 %v578, %v568
  %v699 = vpack.c.b16 %v579, %v569
  %vm820 = vcmask 523264
  %v822 = vsel %vm820, %v197, 0
  %v825 = vsel %vm820, %v199, 0
  %v828 = vsel %vm820, %v201, 0
  %v831 = vsel %vm820, %v203, 0
  %v834 = vsel %vm820, %v205, 0
  %v837 = vsel %vm820, %v207, 0
  %v840 = vsel %vm820, %v209, 0
  %v843 = vsel %vm820, %v211, 0
  %845 = vmatprep.subr.bf16.mxu0 %v581
  %846 = vmatpush1.bf16.msra.mxu0 %v580
  %847 = vmatprep.subr.bf16.mxu0 %v591
  %848 = vmatpush1.bf16.msra.mxu0 %v590
  %849 = vmatprep.subr.bf16.mxu0 %v601
  %850 = vmatpush1.bf16.msra.mxu0 %v600
  %851 = vmatprep.subr.bf16.mxu0 %v611
  %852 = vmatpush1.bf16.msra.mxu0 %v610
  %853 = vmatprep.subr.bf16.mxu0 %v621
  %854 = vmatpush1.bf16.msra.mxu0 %v620
  %855 = vmatprep.subr.bf16.mxu0 %v631
  %856 = vmatpush1.bf16.msra.mxu0 %v630
  %857 = vmatprep.subr.bf16.mxu0 %v641
  %858 = vmatpush1.bf16.msra.mxu0 %v640
  %859 = vmatprep.subr.bf16.mxu0 %v651
  %860 = vmatpush1.bf16.msra.mxu0 %v650
  %861 = vmatprep.subr.bf16.mxu0 %v661
  %862 = vmatpush1.bf16.msra.mxu0 %v660
  %863 = vmatprep.subr.bf16.mxu0 %v671
  %864 = vmatpush1.bf16.msra.mxu0 %v670
  %865 = vmatprep.subr.bf16.mxu0 %v681
  %866 = vmatpush1.bf16.msra.mxu0 %v680
  %867 = vmatprep.subr.bf16.mxu0 %v691
  %868 = vmatpush1.bf16.msra.mxu0 %v690
  %869 = vmatprep.subr.bf16.mxu0 0
  %870 = vmatpush1.bf16.msra.mxu0 0
  %871 = vmatprep.subr.bf16.mxu0 0
  %872 = vmatpush1.bf16.msra.mxu0 0
  %873 = vmatprep.subr.bf16.mxu0 0
  %874 = vmatpush1.bf16.msra.mxu0 0
  %875 = vmatprep.subr.bf16.mxu0 0
  %876 = vmatpush1.bf16.msra.mxu0 0
  %877 = vmatprep.mubr.bf16.mxu0 %v822
  %878 = vmatmul.mubr.bf16.gmra.mrb[0].mxu0 %v196
  %v879 = vpop.f32.mrb[0].mxu0
  %v880 = vadd.f32 0.0, %v879
  %v881 = vpop.f32.mrb[0].mxu0
  %v882 = vadd.f32 0.0, %v881
  %v883 = vpop.f32.mrb[0].mxu0
  %v884 = vadd.f32 0.0, %v883
  %v885 = vpop.f32.mrb[0].mxu0
  %v886 = vadd.f32 0.0, %v885
  %887 = vmatprep.mubr.bf16.mxu0 %v825
  %888 = vmatmul.mubr.bf16.gmra.mrb[0].mxu0 %v198
  %v889 = vpop.f32.mrb[0].mxu0
  %v890 = vadd.f32 0.0, %v889
  %v891 = vpop.f32.mrb[0].mxu0
  %v892 = vadd.f32 0.0, %v891
  %v893 = vpop.f32.mrb[0].mxu0
  %v894 = vadd.f32 0.0, %v893
  %v895 = vpop.f32.mrb[0].mxu0
  %v896 = vadd.f32 0.0, %v895
  %897 = vmatprep.mubr.bf16.mxu0 %v828
  %898 = vmatmul.mubr.bf16.gmra.mrb[0].mxu0 %v200
  %v899 = vpop.f32.mrb[0].mxu0
  %v900 = vadd.f32 0.0, %v899
  %v901 = vpop.f32.mrb[0].mxu0
  %v902 = vadd.f32 0.0, %v901
  %v903 = vpop.f32.mrb[0].mxu0
  %v904 = vadd.f32 0.0, %v903
  %v905 = vpop.f32.mrb[0].mxu0
  %v906 = vadd.f32 0.0, %v905
  %907 = vmatprep.mubr.bf16.mxu0 %v831
  %908 = vmatmul.mubr.bf16.gmra.mrb[0].mxu0 %v202
  %v909 = vpop.f32.mrb[0].mxu0
  %v910 = vadd.f32 0.0, %v909
  %v911 = vpop.f32.mrb[0].mxu0
  %v912 = vadd.f32 0.0, %v911
  %v913 = vpop.f32.mrb[0].mxu0
  %v914 = vadd.f32 0.0, %v913
  %v915 = vpop.f32.mrb[0].mxu0
  %v916 = vadd.f32 0.0, %v915
  %917 = vmatprep.mubr.bf16.mxu0 %v834
  %918 = vmatmul.mubr.bf16.gmra.mrb[0].mxu0 %v204
  %v919 = vpop.f32.mrb[0].mxu0
  %v920 = vadd.f32 0.0, %v919
  %v921 = vpop.f32.mrb[0].mxu0
  %v922 = vadd.f32 0.0, %v921
  %v923 = vpop.f32.mrb[0].mxu0
  %v924 = vadd.f32 0.0, %v923
  %v925 = vpop.f32.mrb[0].mxu0
  %v926 = vadd.f32 0.0, %v925
  %927 = vmatprep.mubr.bf16.mxu0 %v837
  %928 = vmatmul.mubr.bf16.gmra.mrb[0].mxu0 %v206
  %v929 = vpop.f32.mrb[0].mxu0
  %v930 = vadd.f32 0.0, %v929
  %v931 = vpop.f32.mrb[0].mxu0
  %v932 = vadd.f32 0.0, %v931
  %v933 = vpop.f32.mrb[0].mxu0
  %v934 = vadd.f32 0.0, %v933
  %v935 = vpop.f32.mrb[0].mxu0
  %v936 = vadd.f32 0.0, %v935
  %937 = vmatprep.mubr.bf16.mxu0 %v840
  %938 = vmatmul.mubr.bf16.gmra.mrb[0].mxu0 %v208
  %v939 = vpop.f32.mrb[0].mxu0
  %v940 = vadd.f32 0.0, %v939
  %v941 = vpop.f32.mrb[0].mxu0
  %v942 = vadd.f32 0.0, %v941
  %v943 = vpop.f32.mrb[0].mxu0
  %v944 = vadd.f32 0.0, %v943
  %v945 = vpop.f32.mrb[0].mxu0
  %v946 = vadd.f32 0.0, %v945
  %947 = vmatprep.mubr.bf16.mxu0 %v843
  %948 = vmatmul.mubr.bf16.gmra.mrb[0].mxu0 %v210
  %v949 = vpop.f32.mrb[0].mxu0
  %v950 = vadd.f32 0.0, %v949
  %v951 = vpop.f32.mrb[0].mxu0
  %v952 = vadd.f32 0.0, %v951
  %v953 = vpop.f32.mrb[0].mxu0
  %v954 = vadd.f32 0.0, %v953
  %v955 = vpop.f32.mrb[0].mxu0
  %v956 = vadd.f32 0.0, %v955
  %957 = vdwg.mxu0
  %958 = vmatprep.subr.bf16.mxu0 %v583
  %959 = vmatpush1.bf16.msra.mxu0 %v582
  %960 = vmatprep.subr.bf16.mxu0 %v593
  %961 = vmatpush1.bf16.msra.mxu0 %v592
  %962 = vmatprep.subr.bf16.mxu0 %v603
  %963 = vmatpush1.bf16.msra.mxu0 %v602
  %964 = vmatprep.subr.bf16.mxu0 %v613
  %965 = vmatpush1.bf16.msra.mxu0 %v612
  %966 = vmatprep.subr.bf16.mxu0 %v623
  %967 = vmatpush1.bf16.msra.mxu0 %v622
  %968 = vmatprep.subr.bf16.mxu0 %v633
  %969 = vmatpush1.bf16.msra.mxu0 %v632
  %970 = vmatprep.subr.bf16.mxu0 %v643
  %971 = vmatpush1.bf16.msra.mxu0 %v642
  %972 = vmatprep.subr.bf16.mxu0 %v653
  %973 = vmatpush1.bf16.msra.mxu0 %v652
  %974 = vmatprep.subr.bf16.mxu0 %v663
  %975 = vmatpush1.bf16.msra.mxu0 %v662
  %976 = vmatprep.subr.bf16.mxu0 %v673
  %977 = vmatpush1.bf16.msra.mxu0 %v672
  %978 = vmatprep.subr.bf16.mxu0 %v683
  %979 = vmatpush1.bf16.msra.mxu0 %v682
  %980 = vmatprep.subr.bf16.mxu0 %v693
  %981 = vmatpush1.bf16.msra.mxu0 %v692
  %982 = vmatprep.subr.bf16.mxu0 0
  %983 = vmatpush1.bf16.msra.mxu0 0
  %984 = vmatprep.subr.bf16.mxu0 0
  %985 = vmatpush1.bf16.msra.mxu0 0
  %986 = vmatprep.subr.bf16.mxu0 0
  %987 = vmatpush1.bf16.msra.mxu0 0
  %988 = vmatprep.subr.bf16.mxu0 0
  %989 = vmatpush1.bf16.msra.mxu0 0
  %990 = vmatprep.mubr.bf16.mxu0 %v822
  %991 = vmatmul.mubr.bf16.gmra.mrb[0].mxu0 %v196
  %v992 = vpop.f32.mrb[0].mxu0
  %v993 = vadd.f32 0.0, %v992
  %v994 = vpop.f32.mrb[0].mxu0
  %v995 = vadd.f32 0.0, %v994
  %v996 = vpop.f32.mrb[0].mxu0
  %v997 = vadd.f32 0.0, %v996
  %v998 = vpop.f32.mrb[0].mxu0
  %v999 = vadd.f32 0.0, %v998
  %1000 = vmatprep.mubr.bf16.mxu0 %v825
  %1001 = vmatmul.mubr.bf16.gmra.mrb[0].mxu0 %v198
  %v1002 = vpop.f32.mrb[0].mxu0
  %v1003 = vadd.f32 0.0, %v1002
  %v1004 = vpop.f32.mrb[0].mxu0
  %v1005 = vadd.f32 0.0, %v1004
  %v1006 = vpop.f32.mrb[0].mxu0
  %v1007 = vadd.f32 0.0, %v1006
  %v1008 = vpop.f32.mrb[0].mxu0
  %v1009 = vadd.f32 0.0, %v1008
  %1010 = vmatprep.mubr.bf16.mxu0 %v828
  %1011 = vmatmul.mubr.bf16.gmra.mrb[0].mxu0 %v200
  %v1012 = vpop.f32.mrb[0].mxu0
  %v1013 = vadd.f32 0.0, %v1012
  %v1014 = vpop.f32.mrb[0].mxu0
  %v1015 = vadd.f32 0.0, %v1014
  %v1016 = vpop.f32.mrb[0].mxu0
  %v1017 = vadd.f32 0.0, %v1016
  %v1018 = vpop.f32.mrb[0].mxu0
  %v1019 = vadd.f32 0.0, %v1018
  %1020 = vmatprep.mubr.bf16.mxu0 %v831
  %1021 = vmatmul.mubr.bf16.gmra.mrb[0].mxu0 %v202
  %v1022 = vpop.f32.mrb[0].mxu0
  %v1023 = vadd.f32 0.0, %v1022
  %v1024 = vpop.f32.mrb[0].mxu0
  %v1025 = vadd.f32 0.0, %v1024
  %v1026 = vpop.f32.mrb[0].mxu0
  %v1027 = vadd.f32 0.0, %v1026
  %v1028 = vpop.f32.mrb[0].mxu0
  %v1029 = vadd.f32 0.0, %v1028
  %1030 = vmatprep.mubr.bf16.mxu0 %v834
  %1031 = vmatmul.mubr.bf16.gmra.mrb[0].mxu0 %v204
  %v1032 = vpop.f32.mrb[0].mxu0
  %v1033 = vadd.f32 0.0, %v1032
  %v1034 = vpop.f32.mrb[0].mxu0
  %v1035 = vadd.f32 0.0, %v1034
  %v1036 = vpop.f32.mrb[0].mxu0
  %v1037 = vadd.f32 0.0, %v1036
  %v1038 = vpop.f32.mrb[0].mxu0
  %v1039 = vadd.f32 0.0, %v1038
  %1040 = vmatprep.mubr.bf16.mxu0 %v837
  %1041 = vmatmul.mubr.bf16.gmra.mrb[0].mxu0 %v206
  %v1042 = vpop.f32.mrb[0].mxu0
  %v1043 = vadd.f32 0.0, %v1042
  %v1044 = vpop.f32.mrb[0].mxu0
  %v1045 = vadd.f32 0.0, %v1044
  %v1046 = vpop.f32.mrb[0].mxu0
  %v1047 = vadd.f32 0.0, %v1046
  %v1048 = vpop.f32.mrb[0].mxu0
  %v1049 = vadd.f32 0.0, %v1048
  %1050 = vmatprep.mubr.bf16.mxu0 %v840
  %1051 = vmatmul.mubr.bf16.gmra.mrb[0].mxu0 %v208
  %v1052 = vpop.f32.mrb[0].mxu0
  %v1053 = vadd.f32 0.0, %v1052
  %v1054 = vpop.f32.mrb[0].mxu0
  %v1055 = vadd.f32 0.0, %v1054
  %v1056 = vpop.f32.mrb[0].mxu0
  %v1057 = vadd.f32 0.0, %v1056
  %v1058 = vpop.f32.mrb[0].mxu0
  %v1059 = vadd.f32 0.0, %v1058
  %1060 = vmatprep.mubr.bf16.mxu0 %v843
  %1061 = vmatmul.mubr.bf16.gmra.mrb[0].mxu0 %v210
  %v1062 = vpop.f32.mrb[0].mxu0
  %v1063 = vadd.f32 0.0, %v1062
  %v1064 = vpop.f32.mrb[0].mxu0
  %v1065 = vadd.f32 0.0, %v1064
  %v1066 = vpop.f32.mrb[0].mxu0
  %v1067 = vadd.f32 0.0, %v1066
  %v1068 = vpop.f32.mrb[0].mxu0
  %v1069 = vadd.f32 0.0, %v1068
  %1070 = vdwg.mxu0
  %1071 = vmatprep.subr.bf16.mxu0 %v585
  %1072 = vmatpush1.bf16.msra.mxu0 %v584
  %1073 = vmatprep.subr.bf16.mxu0 %v595
  %1074 = vmatpush1.bf16.msra.mxu0 %v594
  %1075 = vmatprep.subr.bf16.mxu0 %v605
  %1076 = vmatpush1.bf16.msra.mxu0 %v604
  %1077 = vmatprep.subr.bf16.mxu0 %v615
  %1078 = vmatpush1.bf16.msra.mxu0 %v614
  %1079 = vmatprep.subr.bf16.mxu0 %v625
  %1080 = vmatpush1.bf16.msra.mxu0 %v624
  %1081 = vmatprep.subr.bf16.mxu0 %v635
  %1082 = vmatpush1.bf16.msra.mxu0 %v634
  %1083 = vmatprep.subr.bf16.mxu0 %v645
  %1084 = vmatpush1.bf16.msra.mxu0 %v644
  %1085 = vmatprep.subr.bf16.mxu0 %v655
  %1086 = vmatpush1.bf16.msra.mxu0 %v654
  %1087 = vmatprep.subr.bf16.mxu0 %v665
  %1088 = vmatpush1.bf16.msra.mxu0 %v664
  %1089 = vmatprep.subr.bf16.mxu0 %v675
  %1090 = vmatpush1.bf16.msra.mxu0 %v674
  %1091 = vmatprep.subr.bf16.mxu0 %v685
  %1092 = vmatpush1.bf16.msra.mxu0 %v684
  %1093 = vmatprep.subr.bf16.mxu0 %v695
  %1094 = vmatpush1.bf16.msra.mxu0 %v694
  %1095 = vmatprep.subr.bf16.mxu0 0
  %1096 = vmatpush1.bf16.msra.mxu0 0
  %1097 = vmatprep.subr.bf16.mxu0 0
  %1098 = vmatpush1.bf16.msra.mxu0 0
  %1099 = vmatprep.subr.bf16.mxu0 0
  %1100 = vmatpush1.bf16.msra.mxu0 0
  %1101 = vmatprep.subr.bf16.mxu0 0
  %1102 = vmatpush1.bf16.msra.mxu0 0
  %1103 = vmatprep.mubr.bf16.mxu0 %v822
  %1104 = vmatmul.mubr.bf16.gmra.mrb[0].mxu0 %v196
  %v1105 = vpop.f32.mrb[0].mxu0
  %v1106 = vadd.f32 0.0, %v1105
  %v1107 = vpop.f32.mrb[0].mxu0
  %v1108 = vadd.f32 0.0, %v1107
  %v1109 = vpop.f32.mrb[0].mxu0
  %v1110 = vadd.f32 0.0, %v1109
  %v1111 = vpop.f32.mrb[0].mxu0
  %v1112 = vadd.f32 0.0, %v1111
  %1113 = vmatprep.mubr.bf16.mxu0 %v825
  %1114 = vmatmul.mubr.bf16.gmra.mrb[0].mxu0 %v198
  %v1115 = vpop.f32.mrb[0].mxu0
  %v1116 = vadd.f32 0.0, %v1115
  %v1117 = vpop.f32.mrb[0].mxu0
  %v1118 = vadd.f32 0.0, %v1117
  %v1119 = vpop.f32.mrb[0].mxu0
  %v1120 = vadd.f32 0.0, %v1119
  %v1121 = vpop.f32.mrb[0].mxu0
  %v1122 = vadd.f32 0.0, %v1121
  %1123 = vmatprep.mubr.bf16.mxu0 %v828
  %1124 = vmatmul.mubr.bf16.gmra.mrb[0].mxu0 %v200
  %v1125 = vpop.f32.mrb[0].mxu0
  %v1126 = vadd.f32 0.0, %v1125
  %v1127 = vpop.f32.mrb[0].mxu0
  %v1128 = vadd.f32 0.0, %v1127
  %v1129 = vpop.f32.mrb[0].mxu0
  %v1130 = vadd.f32 0.0, %v1129
  %v1131 = vpop.f32.mrb[0].mxu0
  %v1132 = vadd.f32 0.0, %v1131
  %1133 = vmatprep.mubr.bf16.mxu0 %v831
  %1134 = vmatmul.mubr.bf16.gmra.mrb[0].mxu0 %v202
  %v1135 = vpop.f32.mrb[0].mxu0
  %v1136 = vadd.f32 0.0, %v1135
  %v1137 = vpop.f32.mrb[0].mxu0
  %v1138 = vadd.f32 0.0, %v1137
  %v1139 = vpop.f32.mrb[0].mxu0
  %v1140 = vadd.f32 0.0, %v1139
  %v1141 = vpop.f32.mrb[0].mxu0
  %v1142 = vadd.f32 0.0, %v1141
  %1143 = vmatprep.mubr.bf16.mxu0 %v834
  %1144 = vmatmul.mubr.bf16.gmra.mrb[0].mxu0 %v204
  %v1145 = vpop.f32.mrb[0].mxu0
  %v1146 = vadd.f32 0.0, %v1145
  %v1147 = vpop.f32.mrb[0].mxu0
  %v1148 = vadd.f32 0.0, %v1147
  %v1149 = vpop.f32.mrb[0].mxu0
  %v1150 = vadd.f32 0.0, %v1149
  %v1151 = vpop.f32.mrb[0].mxu0
  %v1152 = vadd.f32 0.0, %v1151
  %1153 = vmatprep.mubr.bf16.mxu0 %v837
  %1154 = vmatmul.mubr.bf16.gmra.mrb[0].mxu0 %v206
  %v1155 = vpop.f32.mrb[0].mxu0
  %v1156 = vadd.f32 0.0, %v1155
  %v1157 = vpop.f32.mrb[0].mxu0
  %v1158 = vadd.f32 0.0, %v1157
  %v1159 = vpop.f32.mrb[0].mxu0
  %v1160 = vadd.f32 0.0, %v1159
  %v1161 = vpop.f32.mrb[0].mxu0
  %v1162 = vadd.f32 0.0, %v1161
  %1163 = vmatprep.mubr.bf16.mxu0 %v840
  %1164 = vmatmul.mubr.bf16.gmra.mrb[0].mxu0 %v208
  %v1165 = vpop.f32.mrb[0].mxu0
  %v1166 = vadd.f32 0.0, %v1165
  %v1167 = vpop.f32.mrb[0].mxu0
  %v1168 = vadd.f32 0.0, %v1167
  %v1169 = vpop.f32.mrb[0].mxu0
  %v1170 = vadd.f32 0.0, %v1169
  %v1171 = vpop.f32.mrb[0].mxu0
  %v1172 = vadd.f32 0.0, %v1171
  %1173 = vmatprep.mubr.bf16.mxu0 %v843
  %1174 = vmatmul.mubr.bf16.gmra.mrb[0].mxu0 %v210
  %v1175 = vpop.f32.mrb[0].mxu0
  %v1176 = vadd.f32 0.0, %v1175
  %v1177 = vpop.f32.mrb[0].mxu0
  %v1178 = vadd.f32 0.0, %v1177
  %v1179 = vpop.f32.mrb[0].mxu0
  %v1180 = vadd.f32 0.0, %v1179
  %v1181 = vpop.f32.mrb[0].mxu0
  %v1182 = vadd.f32 0.0, %v1181
  %1183 = vdwg.mxu0
  %1184 = vmatprep.subr.bf16.mxu0 %v587
  %1185 = vmatpush1.bf16.msra.mxu0 %v586
  %1186 = vmatprep.subr.bf16.mxu0 %v597
  %1187 = vmatpush1.bf16.msra.mxu0 %v596
  %1188 = vmatprep.subr.bf16.mxu0 %v607
  %1189 = vmatpush1.bf16.msra.mxu0 %v606
  %1190 = vmatprep.subr.bf16.mxu0 %v617
  %1191 = vmatpush1.bf16.msra.mxu0 %v616
  %1192 = vmatprep.subr.bf16.mxu0 %v627
  %1193 = vmatpush1.bf16.msra.mxu0 %v626
  %1194 = vmatprep.subr.bf16.mxu0 %v637
  %1195 = vmatpush1.bf16.msra.mxu0 %v636
  %1196 = vmatprep.subr.bf16.mxu0 %v647
  %1197 = vmatpush1.bf16.msra.mxu0 %v646
  %1198 = vmatprep.subr.bf16.mxu0 %v657
  %1199 = vmatpush1.bf16.msra.mxu0 %v656
  %1200 = vmatprep.subr.bf16.mxu0 %v667
  %1201 = vmatpush1.bf16.msra.mxu0 %v666
  %1202 = vmatprep.subr.bf16.mxu0 %v677
  %1203 = vmatpush1.bf16.msra.mxu0 %v676
  %1204 = vmatprep.subr.bf16.mxu0 %v687
  %1205 = vmatpush1.bf16.msra.mxu0 %v686
  %1206 = vmatprep.subr.bf16.mxu0 %v697
  %1207 = vmatpush1.bf16.msra.mxu0 %v696
  %1208 = vmatprep.subr.bf16.mxu0 0
  %1209 = vmatpush1.bf16.msra.mxu0 0
  %1210 = vmatprep.subr.bf16.mxu0 0
  %1211 = vmatpush1.bf16.msra.mxu0 0
  %1212 = vmatprep.subr.bf16.mxu0 0
  %1213 = vmatpush1.bf16.msra.mxu0 0
  %1214 = vmatprep.subr.bf16.mxu0 0
  %1215 = vmatpush1.bf16.msra.mxu0 0
  %1216 = vmatprep.mubr.bf16.mxu0 %v822
  %1217 = vmatmul.mubr.bf16.gmra.mrb[0].mxu0 %v196
  %v1218 = vpop.f32.mrb[0].mxu0
  %v1219 = vadd.f32 0.0, %v1218
  %v1220 = vpop.f32.mrb[0].mxu0
  %v1221 = vadd.f32 0.0, %v1220
  %v1222 = vpop.f32.mrb[0].mxu0
  %v1223 = vadd.f32 0.0, %v1222
  %v1224 = vpop.f32.mrb[0].mxu0
  %v1225 = vadd.f32 0.0, %v1224
  %1226 = vmatprep.mubr.bf16.mxu0 %v825
  %1227 = vmatmul.mubr.bf16.gmra.mrb[0].mxu0 %v198
  %v1228 = vpop.f32.mrb[0].mxu0
  %v1229 = vadd.f32 0.0, %v1228
  %v1230 = vpop.f32.mrb[0].mxu0
  %v1231 = vadd.f32 0.0, %v1230
  %v1232 = vpop.f32.mrb[0].mxu0
  %v1233 = vadd.f32 0.0, %v1232
  %v1234 = vpop.f32.mrb[0].mxu0
  %v1235 = vadd.f32 0.0, %v1234
  %1236 = vmatprep.mubr.bf16.mxu0 %v828
  %1237 = vmatmul.mubr.bf16.gmra.mrb[0].mxu0 %v200
  %v1238 = vpop.f32.mrb[0].mxu0
  %v1239 = vadd.f32 0.0, %v1238
  %v1240 = vpop.f32.mrb[0].mxu0
  %v1241 = vadd.f32 0.0, %v1240
  %v1242 = vpop.f32.mrb[0].mxu0
  %v1243 = vadd.f32 0.0, %v1242
  %v1244 = vpop.f32.mrb[0].mxu0
  %v1245 = vadd.f32 0.0, %v1244
  %1246 = vmatprep.mubr.bf16.mxu0 %v831
  %1247 = vmatmul.mubr.bf16.gmra.mrb[0].mxu0 %v202
  %v1248 = vpop.f32.mrb[0].mxu0
  %v1249 = vadd.f32 0.0, %v1248
  %v1250 = vpop.f32.mrb[0].mxu0
  %v1251 = vadd.f32 0.0, %v1250
  %v1252 = vpop.f32.mrb[0].mxu0
  %v1253 = vadd.f32 0.0, %v1252
  %v1254 = vpop.f32.mrb[0].mxu0
  %v1255 = vadd.f32 0.0, %v1254
  %1256 = vmatprep.mubr.bf16.mxu0 %v834
  %1257 = vmatmul.mubr.bf16.gmra.mrb[0].mxu0 %v204
  %v1258 = vpop.f32.mrb[0].mxu0
  %v1259 = vadd.f32 0.0, %v1258
  %v1260 = vpop.f32.mrb[0].mxu0
  %v1261 = vadd.f32 0.0, %v1260
  %v1262 = vpop.f32.mrb[0].mxu0
  %v1263 = vadd.f32 0.0, %v1262
  %v1264 = vpop.f32.mrb[0].mxu0
  %v1265 = vadd.f32 0.0, %v1264
  %1266 = vmatprep.mubr.bf16.mxu0 %v837
  %1267 = vmatmul.mubr.bf16.gmra.mrb[0].mxu0 %v206
  %v1268 = vpop.f32.mrb[0].mxu0
  %v1269 = vadd.f32 0.0, %v1268
  %v1270 = vpop.f32.mrb[0].mxu0
  %v1271 = vadd.f32 0.0, %v1270
  %v1272 = vpop.f32.mrb[0].mxu0
  %v1273 = vadd.f32 0.0, %v1272
  %v1274 = vpop.f32.mrb[0].mxu0
  %v1275 = vadd.f32 0.0, %v1274
  %1276 = vmatprep.mubr.bf16.mxu0 %v840
  %1277 = vmatmul.mubr.bf16.gmra.mrb[0].mxu0 %v208
  %v1278 = vpop.f32.mrb[0].mxu0
  %v1279 = vadd.f32 0.0, %v1278
  %v1280 = vpop.f32.mrb[0].mxu0
  %v1281 = vadd.f32 0.0, %v1280
  %v1282 = vpop.f32.mrb[0].mxu0
  %v1283 = vadd.f32 0.0, %v1282
  %v1284 = vpop.f32.mrb[0].mxu0
  %v1285 = vadd.f32 0.0, %v1284
  %1286 = vmatprep.mubr.bf16.mxu0 %v843
  %1287 = vmatmul.mubr.bf16.gmra.mrb[0].mxu0 %v210
  %v1288 = vpop.f32.mrb[0].mxu0
  %v1289 = vadd.f32 0.0, %v1288
  %v1290 = vpop.f32.mrb[0].mxu0
  %v1291 = vadd.f32 0.0, %v1290
  %v1292 = vpop.f32.mrb[0].mxu0
  %v1293 = vadd.f32 0.0, %v1292
  %v1294 = vpop.f32.mrb[0].mxu0
  %v1295 = vadd.f32 0.0, %v1294
  %1296 = vdwg.mxu0
  %1297 = vmatprep.subr.bf16.mxu0 %v589
  %1298 = vmatpush1.bf16.msra.mxu0 %v588
  %1299 = vmatprep.subr.bf16.mxu0 %v599
  %1300 = vmatpush1.bf16.msra.mxu0 %v598
  %1301 = vmatprep.subr.bf16.mxu0 %v609
  %1302 = vmatpush1.bf16.msra.mxu0 %v608
  %1303 = vmatprep.subr.bf16.mxu0 %v619
  %1304 = vmatpush1.bf16.msra.mxu0 %v618
  %1305 = vmatprep.subr.bf16.mxu0 %v629
  %1306 = vmatpush1.bf16.msra.mxu0 %v628
  %1307 = vmatprep.subr.bf16.mxu0 %v639
  %1308 = vmatpush1.bf16.msra.mxu0 %v638
  %1309 = vmatprep.subr.bf16.mxu0 %v649
  %1310 = vmatpush1.bf16.msra.mxu0 %v648
  %1311 = vmatprep.subr.bf16.mxu0 %v659
  %1312 = vmatpush1.bf16.msra.mxu0 %v658
  %1313 = vmatprep.subr.bf16.mxu0 %v669
  %1314 = vmatpush1.bf16.msra.mxu0 %v668
  %1315 = vmatprep.subr.bf16.mxu0 %v679
  %1316 = vmatpush1.bf16.msra.mxu0 %v678
  %1317 = vmatprep.subr.bf16.mxu0 %v689
  %1318 = vmatpush1.bf16.msra.mxu0 %v688
  %1319 = vmatprep.subr.bf16.mxu0 %v699
  %1320 = vmatpush1.bf16.msra.mxu0 %v698
  %1321 = vmatprep.subr.bf16.mxu0 0
  %1322 = vmatpush1.bf16.msra.mxu0 0
  %1323 = vmatprep.subr.bf16.mxu0 0
  %1324 = vmatpush1.bf16.msra.mxu0 0
  %1325 = vmatprep.subr.bf16.mxu0 0
  %1326 = vmatpush1.bf16.msra.mxu0 0
  %1327 = vmatprep.subr.bf16.mxu0 0
  %1328 = vmatpush1.bf16.msra.mxu0 0
  %1329 = vmatprep.mubr.bf16.mxu0 %v822
  %1330 = vmatmul.mubr.bf16.gmra.mrb[0].mxu0 %v196
  %v1331 = vpop.f32.mrb[0].mxu0
  %v1332 = vadd.f32 0.0, %v1331
  %v1333 = vpop.f32.mrb[0].mxu0
  %v1334 = vadd.f32 0.0, %v1333
  %v1335 = vpop.f32.mrb[0].mxu0
  %v1336 = vadd.f32 0.0, %v1335
  %v1337 = vpop.f32.mrb[0].mxu0
  %v1338 = vadd.f32 0.0, %v1337
  %1339 = vmatprep.mubr.bf16.mxu0 %v825
  %1340 = vmatmul.mubr.bf16.gmra.mrb[0].mxu0 %v198
  %v1341 = vpop.f32.mrb[0].mxu0
  %v1342 = vadd.f32 0.0, %v1341
  %v1343 = vpop.f32.mrb[0].mxu0
  %v1344 = vadd.f32 0.0, %v1343
  %v1345 = vpop.f32.mrb[0].mxu0
  %v1346 = vadd.f32 0.0, %v1345
  %v1347 = vpop.f32.mrb[0].mxu0
  %v1348 = vadd.f32 0.0, %v1347
  %1349 = vmatprep.mubr.bf16.mxu0 %v828
  %1350 = vmatmul.mubr.bf16.gmra.mrb[0].mxu0 %v200
  %v1351 = vpop.f32.mrb[0].mxu0
  %v1352 = vadd.f32 0.0, %v1351
  %v1353 = vpop.f32.mrb[0].mxu0
  %v1354 = vadd.f32 0.0, %v1353
  %v1355 = vpop.f32.mrb[0].mxu0
  %v1356 = vadd.f32 0.0, %v1355
  %v1357 = vpop.f32.mrb[0].mxu0
  %v1358 = vadd.f32 0.0, %v1357
  %1359 = vmatprep.mubr.bf16.mxu0 %v831
  %1360 = vmatmul.mubr.bf16.gmra.mrb[0].mxu0 %v202
  %v1361 = vpop.f32.mrb[0].mxu0
  %v1362 = vadd.f32 0.0, %v1361
  %v1363 = vpop.f32.mrb[0].mxu0
  %v1364 = vadd.f32 0.0, %v1363
  %v1365 = vpop.f32.mrb[0].mxu0
  %v1366 = vadd.f32 0.0, %v1365
  %v1367 = vpop.f32.mrb[0].mxu0
  %v1368 = vadd.f32 0.0, %v1367
  %1369 = vmatprep.mubr.bf16.mxu0 %v834
  %1370 = vmatmul.mubr.bf16.gmra.mrb[0].mxu0 %v204
  %v1371 = vpop.f32.mrb[0].mxu0
  %v1372 = vadd.f32 0.0, %v1371
  %v1373 = vpop.f32.mrb[0].mxu0
  %v1374 = vadd.f32 0.0, %v1373
  %v1375 = vpop.f32.mrb[0].mxu0
  %v1376 = vadd.f32 0.0, %v1375
  %v1377 = vpop.f32.mrb[0].mxu0
  %v1378 = vadd.f32 0.0, %v1377
  %1379 = vmatprep.mubr.bf16.mxu0 %v837
  %1380 = vmatmul.mubr.bf16.gmra.mrb[0].mxu0 %v206
  %v1381 = vpop.f32.mrb[0].mxu0
  %v1382 = vadd.f32 0.0, %v1381
  %v1383 = vpop.f32.mrb[0].mxu0
  %v1384 = vadd.f32 0.0, %v1383
  %v1385 = vpop.f32.mrb[0].mxu0
  %v1386 = vadd.f32 0.0, %v1385
  %v1387 = vpop.f32.mrb[0].mxu0
  %v1388 = vadd.f32 0.0, %v1387
  %1389 = vmatprep.mubr.bf16.mxu0 %v840
  %1390 = vmatmul.mubr.bf16.gmra.mrb[0].mxu0 %v208
  %v1391 = vpop.f32.mrb[0].mxu0
  %v1392 = vadd.f32 0.0, %v1391
  %v1393 = vpop.f32.mrb[0].mxu0
  %v1394 = vadd.f32 0.0, %v1393
  %v1395 = vpop.f32.mrb[0].mxu0
  %v1396 = vadd.f32 0.0, %v1395
  %v1397 = vpop.f32.mrb[0].mxu0
  %v1398 = vadd.f32 0.0, %v1397
  %1399 = vmatprep.mubr.bf16.mxu0 %v843
  %1400 = vmatmul.mubr.bf16.gmra.mrb[0].mxu0 %v210
  %v1401 = vpop.f32.mrb[0].mxu0
  %v1402 = vadd.f32 0.0, %v1401
  %v1403 = vpop.f32.mrb[0].mxu0
  %v1404 = vadd.f32 0.0, %v1403
  %v1405 = vpop.f32.mrb[0].mxu0
  %v1406 = vadd.f32 0.0, %v1405
  %v1407 = vpop.f32.mrb[0].mxu0
  %v1408 = vadd.f32 0.0, %v1407
  %1409 = vdwg.mxu0
  %v1410 = vpack.c.bf16 %v884, %v880
  %v1411 = vpack.c.bf16 %v886, %v882
  %v1412 = vpack.c.bf16 %v997, %v993
  %v1413 = vpack.c.bf16 %v999, %v995
  %v1414 = vpack.c.bf16 %v1110, %v1106
  %v1415 = vpack.c.bf16 %v1112, %v1108
  %v1416 = vpack.c.bf16 %v1223, %v1219
  %v1417 = vpack.c.bf16 %v1225, %v1221
  %v1418 = vpack.c.bf16 %v1336, %v1332
  %v1419 = vpack.c.bf16 %v1338, %v1334
  %v1420 = vpack.c.bf16 %v894, %v890
  %v1421 = vpack.c.bf16 %v896, %v892
  %v1422 = vpack.c.bf16 %v1007, %v1003
  %v1423 = vpack.c.bf16 %v1009, %v1005
  %v1424 = vpack.c.bf16 %v1120, %v1116
  %v1425 = vpack.c.bf16 %v1122, %v1118
  %v1426 = vpack.c.bf16 %v1233, %v1229
  %v1427 = vpack.c.bf16 %v1235, %v1231
  %v1428 = vpack.c.bf16 %v1346, %v1342
  %v1429 = vpack.c.bf16 %v1348, %v1344
  %v1430 = vpack.c.bf16 %v904, %v900
  %v1431 = vpack.c.bf16 %v906, %v902
  %v1432 = vpack.c.bf16 %v1017, %v1013
  %v1433 = vpack.c.bf16 %v1019, %v1015
  %v1434 = vpack.c.bf16 %v1130, %v1126
  %v1435 = vpack.c.bf16 %v1132, %v1128
  %v1436 = vpack.c.bf16 %v1243, %v1239
  %v1437 = vpack.c.bf16 %v1245, %v1241
  %v1438 = vpack.c.bf16 %v1356, %v1352
  %v1439 = vpack.c.bf16 %v1358, %v1354
  %v1440 = vpack.c.bf16 %v914, %v910
  %v1441 = vpack.c.bf16 %v916, %v912
  %v1442 = vpack.c.bf16 %v1027, %v1023
  %v1443 = vpack.c.bf16 %v1029, %v1025
  %v1444 = vpack.c.bf16 %v1140, %v1136
  %v1445 = vpack.c.bf16 %v1142, %v1138
  %v1446 = vpack.c.bf16 %v1253, %v1249
  %v1447 = vpack.c.bf16 %v1255, %v1251
  %v1448 = vpack.c.bf16 %v1366, %v1362
  %v1449 = vpack.c.bf16 %v1368, %v1364
  %v1450 = vpack.c.bf16 %v924, %v920
  %v1451 = vpack.c.bf16 %v926, %v922
  %v1452 = vpack.c.bf16 %v1037, %v1033
  %v1453 = vpack.c.bf16 %v1039, %v1035
  %v1454 = vpack.c.bf16 %v1150, %v1146
  %v1455 = vpack.c.bf16 %v1152, %v1148
  %v1456 = vpack.c.bf16 %v1263, %v1259
  %v1457 = vpack.c.bf16 %v1265, %v1261
  %v1458 = vpack.c.bf16 %v1376, %v1372
  %v1459 = vpack.c.bf16 %v1378, %v1374
  %v1460 = vpack.c.bf16 %v934, %v930
  %v1461 = vpack.c.bf16 %v936, %v932
  %v1462 = vpack.c.bf16 %v1047, %v1043
  %v1463 = vpack.c.bf16 %v1049, %v1045
  %v1464 = vpack.c.bf16 %v1160, %v1156
  %v1465 = vpack.c.bf16 %v1162, %v1158
  %v1466 = vpack.c.bf16 %v1273, %v1269
  %v1467 = vpack.c.bf16 %v1275, %v1271
  %v1468 = vpack.c.bf16 %v1386, %v1382
  %v1469 = vpack.c.bf16 %v1388, %v1384
  %v1470 = vpack.c.bf16 %v944, %v940
  %v1471 = vpack.c.bf16 %v946, %v942
  %v1472 = vpack.c.bf16 %v1057, %v1053
  %v1473 = vpack.c.bf16 %v1059, %v1055
  %v1474 = vpack.c.bf16 %v1170, %v1166
  %v1475 = vpack.c.bf16 %v1172, %v1168
  %v1476 = vpack.c.bf16 %v1283, %v1279
  %v1477 = vpack.c.bf16 %v1285, %v1281
  %v1478 = vpack.c.bf16 %v1396, %v1392
  %v1479 = vpack.c.bf16 %v1398, %v1394
  %v1480 = vpack.c.bf16 %v954, %v950
  %v1481 = vpack.c.bf16 %v956, %v952
  %v1482 = vpack.c.bf16 %v1067, %v1063
  %v1483 = vpack.c.bf16 %v1069, %v1065
  %v1484 = vpack.c.bf16 %v1180, %v1176
  %v1485 = vpack.c.bf16 %v1182, %v1178
  %v1486 = vpack.c.bf16 %v1293, %v1289
  %v1487 = vpack.c.bf16 %v1295, %v1291
  %v1488 = vpack.c.bf16 %v1406, %v1402
  %v1489 = vpack.c.bf16 %v1408, %v1404
  %v1570 = vunpack.c.l.b16 %v1410
  %v1571 = vunpack.c.l.b16 %v1411
  %v1572 = vunpack.c.l.b16 %v1412
  %v1573 = vunpack.c.l.b16 %v1413
  %v1574 = vunpack.c.l.b16 %v1414
  %v1575 = vunpack.c.l.b16 %v1415
  %v1576 = vunpack.c.l.b16 %v1416
  %v1577 = vunpack.c.l.b16 %v1417
  %v1578 = vunpack.c.l.b16 %v1418
  %v1579 = vunpack.c.l.b16 %v1419
  %v1580 = vunpack.c.h.b16 %v1410
  %v1581 = vunpack.c.h.b16 %v1411
  %v1582 = vunpack.c.h.b16 %v1412
  %v1583 = vunpack.c.h.b16 %v1413
  %v1584 = vunpack.c.h.b16 %v1414
  %v1585 = vunpack.c.h.b16 %v1415
  %v1586 = vunpack.c.h.b16 %v1416
  %v1587 = vunpack.c.h.b16 %v1417
  %v1588 = vunpack.c.h.b16 %v1418
  %v1589 = vunpack.c.h.b16 %v1419
  %v1590 = vunpack.c.l.b16 %v1420
  %v1591 = vunpack.c.l.b16 %v1421
  %v1592 = vunpack.c.l.b16 %v1422
  %v1593 = vunpack.c.l.b16 %v1423
  %v1594 = vunpack.c.l.b16 %v1424
  %v1595 = vunpack.c.l.b16 %v1425
  %v1596 = vunpack.c.l.b16 %v1426
  %v1597 = vunpack.c.l.b16 %v1427
  %v1598 = vunpack.c.l.b16 %v1428
  %v1599 = vunpack.c.l.b16 %v1429
  %v1600 = vunpack.c.h.b16 %v1420
  %v1601 = vunpack.c.h.b16 %v1421
  %v1602 = vunpack.c.h.b16 %v1422
  %v1603 = vunpack.c.h.b16 %v1423
  %v1604 = vunpack.c.h.b16 %v1424
  %v1605 = vunpack.c.h.b16 %v1425
  %v1606 = vunpack.c.h.b16 %v1426
  %v1607 = vunpack.c.h.b16 %v1427
  %v1608 = vunpack.c.h.b16 %v1428
  %v1609 = vunpack.c.h.b16 %v1429
  %v1610 = vunpack.c.l.b16 %v1430
  %v1611 = vunpack.c.l.b16 %v1431
  %v1612 = vunpack.c.l.b16 %v1432
  %v1613 = vunpack.c.l.b16 %v1433
  %v1614 = vunpack.c.l.b16 %v1434
  %v1615 = vunpack.c.l.b16 %v1435
  %v1616 = vunpack.c.l.b16 %v1436
  %v1617 = vunpack.c.l.b16 %v1437
  %v1618 = vunpack.c.l.b16 %v1438
  %v1619 = vunpack.c.l.b16 %v1439
  %v1620 = vunpack.c.h.b16 %v1430
  %v1621 = vunpack.c.h.b16 %v1431
  %v1622 = vunpack.c.h.b16 %v1432
  %v1623 = vunpack.c.h.b16 %v1433
  %v1624 = vunpack.c.h.b16 %v1434
  %v1625 = vunpack.c.h.b16 %v1435
  %v1626 = vunpack.c.h.b16 %v1436
  %v1627 = vunpack.c.h.b16 %v1437
  %v1628 = vunpack.c.h.b16 %v1438
  %v1629 = vunpack.c.h.b16 %v1439
  %v1630 = vunpack.c.l.b16 %v1440
  %v1631 = vunpack.c.l.b16 %v1441
  %v1632 = vunpack.c.l.b16 %v1442
  %v1633 = vunpack.c.l.b16 %v1443
  %v1634 = vunpack.c.l.b16 %v1444
  %v1635 = vunpack.c.l.b16 %v1445
  %v1636 = vunpack.c.l.b16 %v1446
  %v1637 = vunpack.c.l.b16 %v1447
  %v1638 = vunpack.c.l.b16 %v1448
  %v1639 = vunpack.c.l.b16 %v1449
  %v1640 = vunpack.c.h.b16 %v1440
  %v1641 = vunpack.c.h.b16 %v1441
  %v1642 = vunpack.c.h.b16 %v1442
  %v1643 = vunpack.c.h.b16 %v1443
  %v1644 = vunpack.c.h.b16 %v1444
  %v1645 = vunpack.c.h.b16 %v1445
  %v1646 = vunpack.c.h.b16 %v1446
  %v1647 = vunpack.c.h.b16 %v1447
  %v1648 = vunpack.c.h.b16 %v1448
  %v1649 = vunpack.c.h.b16 %v1449
  %v1650 = vunpack.c.l.b16 %v1450
  %v1651 = vunpack.c.l.b16 %v1451
  %v1652 = vunpack.c.l.b16 %v1452
  %v1653 = vunpack.c.l.b16 %v1453
  %v1654 = vunpack.c.l.b16 %v1454
  %v1655 = vunpack.c.l.b16 %v1455
  %v1656 = vunpack.c.l.b16 %v1456
  %v1657 = vunpack.c.l.b16 %v1457
  %v1658 = vunpack.c.l.b16 %v1458
  %v1659 = vunpack.c.l.b16 %v1459
  %v1660 = vunpack.c.h.b16 %v1450
  %v1661 = vunpack.c.h.b16 %v1451
  %v1662 = vunpack.c.h.b16 %v1452
  %v1663 = vunpack.c.h.b16 %v1453
  %v1664 = vunpack.c.h.b16 %v1454
  %v1665 = vunpack.c.h.b16 %v1455
  %v1666 = vunpack.c.h.b16 %v1456
  %v1667 = vunpack.c.h.b16 %v1457
  %v1668 = vunpack.c.h.b16 %v1458
  %v1669 = vunpack.c.h.b16 %v1459
  %v1670 = vunpack.c.l.b16 %v1460
  %v1671 = vunpack.c.l.b16 %v1461
  %v1672 = vunpack.c.l.b16 %v1462
  %v1673 = vunpack.c.l.b16 %v1463
  %v1674 = vunpack.c.l.b16 %v1464
  %v1675 = vunpack.c.l.b16 %v1465
  %v1676 = vunpack.c.l.b16 %v1466
  %v1677 = vunpack.c.l.b16 %v1467
  %v1678 = vunpack.c.l.b16 %v1468
  %v1679 = vunpack.c.l.b16 %v1469
  %v1680 = vunpack.c.h.b16 %v1460
  %v1681 = vunpack.c.h.b16 %v1461
  %v1682 = vunpack.c.h.b16 %v1462
  %v1683 = vunpack.c.h.b16 %v1463
  %v1684 = vunpack.c.h.b16 %v1464
  %v1685 = vunpack.c.h.b16 %v1465
  %v1686 = vunpack.c.h.b16 %v1466
  %v1687 = vunpack.c.h.b16 %v1467
  %v1688 = vunpack.c.h.b16 %v1468
  %v1689 = vunpack.c.h.b16 %v1469
  %v1690 = vunpack.c.l.b16 %v1470
  %v1691 = vunpack.c.l.b16 %v1471
  %v1692 = vunpack.c.l.b16 %v1472
  %v1693 = vunpack.c.l.b16 %v1473
  %v1694 = vunpack.c.l.b16 %v1474
  %v1695 = vunpack.c.l.b16 %v1475
  %v1696 = vunpack.c.l.b16 %v1476
  %v1697 = vunpack.c.l.b16 %v1477
  %v1698 = vunpack.c.l.b16 %v1478
  %v1699 = vunpack.c.l.b16 %v1479
  %v1700 = vunpack.c.h.b16 %v1470
  %v1701 = vunpack.c.h.b16 %v1471
  %v1702 = vunpack.c.h.b16 %v1472
  %v1703 = vunpack.c.h.b16 %v1473
  %v1704 = vunpack.c.h.b16 %v1474
  %v1705 = vunpack.c.h.b16 %v1475
  %v1706 = vunpack.c.h.b16 %v1476
  %v1707 = vunpack.c.h.b16 %v1477
  %v1708 = vunpack.c.h.b16 %v1478
  %v1709 = vunpack.c.h.b16 %v1479
  %v1710 = vunpack.c.l.b16 %v1480
  %v1711 = vunpack.c.l.b16 %v1481
  %v1712 = vunpack.c.l.b16 %v1482
  %v1713 = vunpack.c.l.b16 %v1483
  %v1714 = vunpack.c.l.b16 %v1484
  %v1715 = vunpack.c.l.b16 %v1485
  %v1716 = vunpack.c.l.b16 %v1486
  %v1717 = vunpack.c.l.b16 %v1487
  %v1718 = vunpack.c.l.b16 %v1488
  %v1719 = vunpack.c.l.b16 %v1489
  %v1720 = vunpack.c.h.b16 %v1480
  %v1721 = vunpack.c.h.b16 %v1481
  %v1722 = vunpack.c.h.b16 %v1482
  %v1723 = vunpack.c.h.b16 %v1483
  %v1724 = vunpack.c.h.b16 %v1484
  %v1725 = vunpack.c.h.b16 %v1485
  %v1726 = vunpack.c.h.b16 %v1486
  %v1727 = vunpack.c.h.b16 %v1487
  %v1728 = vunpack.c.h.b16 %v1488
  %v1729 = vunpack.c.h.b16 %v1489
  %v1730 = vpack.c.b16 %v1571, %v1570
  %v1731 = vpack.c.b16 %v1573, %v1572
  %v1732 = vpack.c.b16 %v1575, %v1574
  %v1733 = vpack.c.b16 %v1577, %v1576
  %v1734 = vpack.c.b16 %v1579, %v1578
  %v1735 = vpack.c.b16 %v1581, %v1580
  %v1736 = vpack.c.b16 %v1583, %v1582
  %v1737 = vpack.c.b16 %v1585, %v1584
  %v1738 = vpack.c.b16 %v1587, %v1586
  %v1739 = vpack.c.b16 %v1589, %v1588
  %v1740 = vpack.c.b16 %v1591, %v1590
  %v1741 = vpack.c.b16 %v1593, %v1592
  %v1742 = vpack.c.b16 %v1595, %v1594
  %v1743 = vpack.c.b16 %v1597, %v1596
  %v1744 = vpack.c.b16 %v1599, %v1598
  %v1745 = vpack.c.b16 %v1601, %v1600
  %v1746 = vpack.c.b16 %v1603, %v1602
  %v1747 = vpack.c.b16 %v1605, %v1604
  %v1748 = vpack.c.b16 %v1607, %v1606
  %v1749 = vpack.c.b16 %v1609, %v1608
  %v1750 = vpack.c.b16 %v1611, %v1610
  %v1751 = vpack.c.b16 %v1613, %v1612
  %v1752 = vpack.c.b16 %v1615, %v1614
  %v1753 = vpack.c.b16 %v1617, %v1616
  %v1754 = vpack.c.b16 %v1619, %v1618
  %v1755 = vpack.c.b16 %v1621, %v1620
  %v1756 = vpack.c.b16 %v1623, %v1622
  %v1757 = vpack.c.b16 %v1625, %v1624
  %v1758 = vpack.c.b16 %v1627, %v1626
  %v1759 = vpack.c.b16 %v1629, %v1628
  %v1760 = vpack.c.b16 %v1631, %v1630
  %v1761 = vpack.c.b16 %v1633, %v1632
  %v1762 = vpack.c.b16 %v1635, %v1634
  %v1763 = vpack.c.b16 %v1637, %v1636
  %v1764 = vpack.c.b16 %v1639, %v1638
  %v1765 = vpack.c.b16 %v1641, %v1640
  %v1766 = vpack.c.b16 %v1643, %v1642
  %v1767 = vpack.c.b16 %v1645, %v1644
  %v1768 = vpack.c.b16 %v1647, %v1646
  %v1769 = vpack.c.b16 %v1649, %v1648
  %v1770 = vpack.c.b16 %v1651, %v1650
  %v1771 = vpack.c.b16 %v1653, %v1652
  %v1772 = vpack.c.b16 %v1655, %v1654
  %v1773 = vpack.c.b16 %v1657, %v1656
  %v1774 = vpack.c.b16 %v1659, %v1658
  %v1775 = vpack.c.b16 %v1661, %v1660
  %v1776 = vpack.c.b16 %v1663, %v1662
  %v1777 = vpack.c.b16 %v1665, %v1664
  %v1778 = vpack.c.b16 %v1667, %v1666
  %v1779 = vpack.c.b16 %v1669, %v1668
  %v1780 = vpack.c.b16 %v1671, %v1670
  %v1781 = vpack.c.b16 %v1673, %v1672
  %v1782 = vpack.c.b16 %v1675, %v1674
  %v1783 = vpack.c.b16 %v1677, %v1676
  %v1784 = vpack.c.b16 %v1679, %v1678
  %v1785 = vpack.c.b16 %v1681, %v1680
  %v1786 = vpack.c.b16 %v1683, %v1682
  %v1787 = vpack.c.b16 %v1685, %v1684
  %v1788 = vpack.c.b16 %v1687, %v1686
  %v1789 = vpack.c.b16 %v1689, %v1688
  %v1790 = vpack.c.b16 %v1691, %v1690
  %v1791 = vpack.c.b16 %v1693, %v1692
  %v1792 = vpack.c.b16 %v1695, %v1694
  %v1793 = vpack.c.b16 %v1697, %v1696
  %v1794 = vpack.c.b16 %v1699, %v1698
  %v1795 = vpack.c.b16 %v1701, %v1700
  %v1796 = vpack.c.b16 %v1703, %v1702
  %v1797 = vpack.c.b16 %v1705, %v1704
  %v1798 = vpack.c.b16 %v1707, %v1706
  %v1799 = vpack.c.b16 %v1709, %v1708
  %v1800 = vpack.c.b16 %v1711, %v1710
  %v1801 = vpack.c.b16 %v1713, %v1712
  %v1802 = vpack.c.b16 %v1715, %v1714
  %v1803 = vpack.c.b16 %v1717, %v1716
  %v1804 = vpack.c.b16 %v1719, %v1718
  %v1805 = vpack.c.b16 %v1721, %v1720
  %v1806 = vpack.c.b16 %v1723, %v1722
  %v1807 = vpack.c.b16 %v1725, %v1724
  %v1808 = vpack.c.b16 %v1727, %v1726
  %v1809 = vpack.c.b16 %v1729, %v1728
  %1890 = vst [vmem:[%s2] sm:$0xff] %v1730
  %1891 = vst [vmem:[%s2 + $0x8] sm:$0xff] %v1731
  %1892 = vst [vmem:[%s2 + $0x10] sm:$0xff] %v1732
  %1893 = vst [vmem:[%s2 + $0x18] sm:$0xff] %v1733
  %1894 = vst [vmem:[%s2 + $0x20] sm:$0xff] %v1734
  %1895 = vst [vmem:[%s2 + $0x28] sm:$0xff] %v1735
  %1896 = vst [vmem:[%s2 + $0x30] sm:$0xff] %v1736
  %1897 = vst [vmem:[%s2 + $0x38] sm:$0xff] %v1737
  %1898 = vst [vmem:[%s2 + $0x40] sm:$0xff] %v1738
  %1899 = vst [vmem:[%s2 + $0x48] sm:$0xff] %v1739
  %1900 = vst [vmem:[%s2 + $0x50] sm:$0xff] %v1740
  %1901 = vst [vmem:[%s2 + $0x58] sm:$0xff] %v1741
  %1902 = vst [vmem:[%s2 + $0x60] sm:$0xff] %v1742
  %1903 = vst [vmem:[%s2 + $0x68] sm:$0xff] %v1743
  %1904 = vst [vmem:[%s2 + $0x70] sm:$0xff] %v1744
  %1905 = vst [vmem:[%s2 + $0x78] sm:$0xff] %v1745
  %1906 = vst [vmem:[%s2 + $0x80] sm:$0xff] %v1746
  %1907 = vst [vmem:[%s2 + $0x88] sm:$0xff] %v1747
  %1908 = vst [vmem:[%s2 + $0x90] sm:$0xff] %v1748
  %1909 = vst [vmem:[%s2 + $0x98] sm:$0xff] %v1749
  %1910 = vst [vmem:[%s2 + $0xa0] sm:$0xff] %v1750
  %1911 = vst [vmem:[%s2 + $0xa8] sm:$0xff] %v1751
  %1912 = vst [vmem:[%s2 + $0xb0] sm:$0xff] %v1752
  %1913 = vst [vmem:[%s2 + $0xb8] sm:$0xff] %v1753
  %1914 = vst [vmem:[%s2 + $0xc0] sm:$0xff] %v1754
  %1915 = vst [vmem:[%s2 + $0xc8] sm:$0xff] %v1755
  %1916 = vst [vmem:[%s2 + $0xd0] sm:$0xff] %v1756
  %1917 = vst [vmem:[%s2 + $0xd8] sm:$0xff] %v1757
  %1918 = vst [vmem:[%s2 + $0xe0] sm:$0xff] %v1758
  %1919 = vst [vmem:[%s2 + $0xe8] sm:$0xff] %v1759
  %1920 = vst [vmem:[%s2 + $0xf0] sm:$0xff] %v1760
  %1921 = vst [vmem:[%s2 + $0xf8] sm:$0xff] %v1761
  %1922 = vst [vmem:[%s2 + $0x100] sm:$0xff] %v1762
  %1923 = vst [vmem:[%s2 + $0x108] sm:$0xff] %v1763
  %1924 = vst [vmem:[%s2 + $0x110] sm:$0xff] %v1764
  %1925 = vst [vmem:[%s2 + $0x118] sm:$0xff] %v1765
  %1926 = vst [vmem:[%s2 + $0x120] sm:$0xff] %v1766
  %1927 = vst [vmem:[%s2 + $0x128] sm:$0xff] %v1767
  %1928 = vst [vmem:[%s2 + $0x130] sm:$0xff] %v1768
  %1929 = vst [vmem:[%s2 + $0x138] sm:$0xff] %v1769
  %1930 = vst [vmem:[%s2 + $0x140] sm:$0xff] %v1770
  %1931 = vst [vmem:[%s2 + $0x148] sm:$0xff] %v1771
  %1932 = vst [vmem:[%s2 + $0x150] sm:$0xff] %v1772
  %1933 = vst [vmem:[%s2 + $0x158] sm:$0xff] %v1773
  %1934 = vst [vmem:[%s2 + $0x160] sm:$0xff] %v1774
  %1935 = vst [vmem:[%s2 + $0x168] sm:$0xff] %v1775
  %1936 = vst [vmem:[%s2 + $0x170] sm:$0xff] %v1776
  %1937 = vst [vmem:[%s2 + $0x178] sm:$0xff] %v1777
  %1938 = vst [vmem:[%s2 + $0x180] sm:$0xff] %v1778
  %1939 = vst [vmem:[%s2 + $0x188] sm:$0xff] %v1779
  %1940 = vst [vmem:[%s2 + $0x190] sm:$0xff] %v1780
  %1941 = vst [vmem:[%s2 + $0x198] sm:$0xff] %v1781
  %1942 = vst [vmem:[%s2 + $0x1a0] sm:$0xff] %v1782
  %1943 = vst [vmem:[%s2 + $0x1a8] sm:$0xff] %v1783
  %1944 = vst [vmem:[%s2 + $0x1b0] sm:$0xff] %v1784
  %1945 = vst [vmem:[%s2 + $0x1b8] sm:$0xff] %v1785
  %1946 = vst [vmem:[%s2 + $0x1c0] sm:$0xff] %v1786
  %1947 = vst [vmem:[%s2 + $0x1c8] sm:$0xff] %v1787
  %1948 = vst [vmem:[%s2 + $0x1d0] sm:$0xff] %v1788
  %1949 = vst [vmem:[%s2 + $0x1d8] sm:$0xff] %v1789
  %1950 = vst [vmem:[%s2 + $0x1e0] sm:$0xff] %v1790
  %1951 = vst [vmem:[%s2 + $0x1e8] sm:$0xff] %v1791
  %1952 = vst [vmem:[%s2 + $0x1f0] sm:$0xff] %v1792
  %1953 = vst [vmem:[%s2 + $0x1f8] sm:$0xff] %v1793
  %1954 = vst [vmem:[%s2 + $0x200] sm:$0xff] %v1794
  %1955 = vst [vmem:[%s2 + $0x208] sm:$0xff] %v1795
  %1956 = vst [vmem:[%s2 + $0x210] sm:$0xff] %v1796
  %1957 = vst [vmem:[%s2 + $0x218] sm:$0xff] %v1797
  %1958 = vst [vmem:[%s2 + $0x220] sm:$0xff] %v1798
  %1959 = vst [vmem:[%s2 + $0x228] sm:$0xff] %v1799
  %1960 = vst [vmem:[%s2 + $0x230] sm:$0xff] %v1800
  %1961 = vst [vmem:[%s2 + $0x238] sm:$0xff] %v1801
  %1962 = vst [vmem:[%s2 + $0x240] sm:$0xff] %v1802
  %1963 = vst [vmem:[%s2 + $0x248] sm:$0xff] %v1803
  %1964 = vst [vmem:[%s2 + $0x250] sm:$0xff] %v1804
  %1965 = vst [vmem:[%s2 + $0x258] sm:$0xff] %v1805
  %1966 = vst [vmem:[%s2 + $0x260] sm:$0xff] %v1806
  %1967 = vst [vmem:[%s2 + $0x268] sm:$0xff] %v1807
  %1968 = vst [vmem:[%s2 + $0x270] sm:$0xff] %v1808
  %1969 = vst [vmem:[%s2 + $0x278] sm:$0xff] %v1809
  // Predicated region
  $region10: #{forward.4} parent=0 // pred_check
    _
  $region11: #{forward.4} parent=0 // pred_check_branch
    %1971 = sbr.rel (0) target = $region13
  $region12: #{forward.4} parent=0 // pred_region
    _
  $region13: #{forward.4} parent=0 // pred_fallthru
    _
  // Predicated region
  $region14: #{forward.4} parent=0 // pred_check
    _
  $region15: #{forward.4} parent=0 // pred_check_branch
    %1973 = sbr.rel (0) target = $region17
  $region16: #{forward.4} parent=0 // pred_region
    _
  $region17: #{forward.4} parent=0 // pred_fallthru
    _

// kernel: forward.3
$region0: #{forward.3}
  #allocation0 [shape = 'u32[]', space=smem, size = 0x4, offset = 0x4, fixed_abs, tag = 'smem constant byte address 0x4 - core index']
  #allocation1 [shape = 'u32[144,128]{1,0:T(1,128)}', space=vmem, size = 0x12000, scoped, tag = 'internal scratch']
  %s0 = inlined_call_operand.vmem [shape: f32[16,512], index: 0, kind: input, shape index: {}]
  %s1 = inlined_call_operand.vmem [shape: f32[512,20], index: 1, kind: input, shape index: {}]
  %s2 = inlined_call_operand.vmem [shape: f32[16,20], index: 2, kind: output, shape index: {}]
  %s3 = sld [smem:[#allocation0]]
  $region18: #{forward.3} parent=0
    _
  %s5 = ssub.s32 1, %s3
  %s6 = scalar_select 0, %s5, %s3
  // Predicated region
  $region2: #{forward.3} parent=0 // pred_check
    _
  $region3: #{forward.3} parent=0 // pred_check_branch
    %8 = sbr.rel (0) target = $region5
  $region4: #{forward.3} parent=0 // pred_region
    _
  $region5: #{forward.3} parent=0 // pred_fallthru
    _
  // Predicated region
  $region6: #{forward.3} parent=0 // pred_check
    _
  $region7: #{forward.3} parent=0 // pred_check_branch
    %10 = sbr.rel (0) target = $region9
  $region8: #{forward.3} parent=0 // pred_region
    _
  $region9: #{forward.3} parent=0 // pred_fallthru
    _
  %v11 = vld [vmem:[%s0] sm:$0xff]
  %v12 = vld [vmem:[%s0 + $0x8] sm:$0xff]
  %v13 = vld [vmem:[%s0 + $0x10] sm:$0xff]
  %v14 = vld [vmem:[%s0 + $0x18] sm:$0xff]
  %v15 = vld [vmem:[%s0 + $0x20] sm:$0xff]
  %v16 = vld [vmem:[%s0 + $0x28] sm:$0xff]
  %v17 = vld [vmem:[%s0 + $0x30] sm:$0xff]
  %v18 = vld [vmem:[%s0 + $0x38] sm:$0xff]
  %v19 = vld [vmem:[%s1] sm:$0xff]
  %v20 = vld [vmem:[%s1 + $0x8] sm:$0xff]
  %v21 = vld [vmem:[%s1 + $0x10] sm:$0xff]
  %v22 = vld [vmem:[%s1 + $0x18] sm:$0xff]
  %v23 = vld [vmem:[%s1 + $0x20] sm:$0xff]
  %v24 = vld [vmem:[%s1 + $0x28] sm:$0xff]
  %v25 = vld [vmem:[%s1 + $0x30] sm:$0xff]
  %v26 = vld [vmem:[%s1 + $0x38] sm:$0xff]
  %v27 = vld [vmem:[%s1 + $0x40] sm:$0xff]
  %v28 = vld [vmem:[%s1 + $0x48] sm:$0xff]
  %v29 = vld [vmem:[%s1 + $0x50] sm:$0xff]
  %v30 = vld [vmem:[%s1 + $0x58] sm:$0xff]
  %v31 = vld [vmem:[%s1 + $0x60] sm:$0xff]
  %v32 = vld [vmem:[%s1 + $0x68] sm:$0xff]
  %v33 = vld [vmem:[%s1 + $0x70] sm:$0xff]
  %v34 = vld [vmem:[%s1 + $0x78] sm:$0xff]
  %v35 = vld [vmem:[%s1 + $0x80] sm:$0xff]
  %v36 = vld [vmem:[%s1 + $0x88] sm:$0xff]
  %v37 = vld [vmem:[%s1 + $0x90] sm:$0xff]
  %v38 = vld [vmem:[%s1 + $0x98] sm:$0xff]
  %v39 = vld [vmem:[%s1 + $0xa0] sm:$0xff]
  %v40 = vld [vmem:[%s1 + $0xa8] sm:$0xff]
  %v41 = vld [vmem:[%s1 + $0xb0] sm:$0xff]
  %v42 = vld [vmem:[%s1 + $0xb8] sm:$0xff]
  %v43 = vld [vmem:[%s1 + $0xc0] sm:$0xff]
  %v44 = vld [vmem:[%s1 + $0xc8] sm:$0xff]
  %v45 = vld [vmem:[%s1 + $0xd0] sm:$0xff]
  %v46 = vld [vmem:[%s1 + $0xd8] sm:$0xff]
  %v47 = vld [vmem:[%s1 + $0xe0] sm:$0xff]
  %v48 = vld [vmem:[%s1 + $0xe8] sm:$0xff]
  %v49 = vld [vmem:[%s1 + $0xf0] sm:$0xff]
  %v50 = vld [vmem:[%s1 + $0xf8] sm:$0xff]
  %v51 = vld [vmem:[%s1 + $0x100] sm:$0xff]
  %v52 = vld [vmem:[%s1 + $0x108] sm:$0xff]
  %v53 = vld [vmem:[%s1 + $0x110] sm:$0xff]
  %v54 = vld [vmem:[%s1 + $0x118] sm:$0xff]
  %v55 = vld [vmem:[%s1 + $0x120] sm:$0xff]
  %v56 = vld [vmem:[%s1 + $0x128] sm:$0xff]
  %v57 = vld [vmem:[%s1 + $0x130] sm:$0xff]
  %v58 = vld [vmem:[%s1 + $0x138] sm:$0xff]
  %v59 = vld [vmem:[%s1 + $0x140] sm:$0xff]
  %v60 = vld [vmem:[%s1 + $0x148] sm:$0xff]
  %v61 = vld [vmem:[%s1 + $0x150] sm:$0xff]
  %v62 = vld [vmem:[%s1 + $0x158] sm:$0xff]
  %v63 = vld [vmem:[%s1 + $0x160] sm:$0xff]
  %v64 = vld [vmem:[%s1 + $0x168] sm:$0xff]
  %v65 = vld [vmem:[%s1 + $0x170] sm:$0xff]
  %v66 = vld [vmem:[%s1 + $0x178] sm:$0xff]
  %v67 = vld [vmem:[%s1 + $0x180] sm:$0xff]
  %v68 = vld [vmem:[%s1 + $0x188] sm:$0xff]
  %v69 = vld [vmem:[%s1 + $0x190] sm:$0xff]
  %v70 = vld [vmem:[%s1 + $0x198] sm:$0xff]
  %v71 = vld [vmem:[%s1 + $0x1a0] sm:$0xff]
  %v72 = vld [vmem:[%s1 + $0x1a8] sm:$0xff]
  %v73 = vld [vmem:[%s1 + $0x1b0] sm:$0xff]
  %v74 = vld [vmem:[%s1 + $0x1b8] sm:$0xff]
  %v75 = vld [vmem:[%s1 + $0x1c0] sm:$0xff]
  %v76 = vld [vmem:[%s1 + $0x1c8] sm:$0xff]
  %v77 = vld [vmem:[%s1 + $0x1d0] sm:$0xff]
  %v78 = vld [vmem:[%s1 + $0x1d8] sm:$0xff]
  %v79 = vld [vmem:[%s1 + $0x1e0] sm:$0xff]
  %v80 = vld [vmem:[%s1 + $0x1e8] sm:$0xff]
  %v81 = vld [vmem:[%s1 + $0x1f0] sm:$0xff]
  %v82 = vld [vmem:[%s1 + $0x1f8] sm:$0xff]
  %83 = vmatprep.subr.mxu0 0.0
  %84 = vmatpush1.msra.mxu0 %v19
  %85 = vmatprep.subr.mxu0 0.0
  %86 = vmatpush1.msra.mxu0 %v20
  %87 = vmatprep.subr.mxu0 0.0
  %88 = vmatpush1.msra.mxu0 %v21
  %89 = vmatprep.subr.mxu0 0.0
  %90 = vmatpush1.msra.mxu0 %v22
  %91 = vmatprep.subr.mxu0 0.0
  %92 = vmatpush1.msra.mxu0 %v23
  %93 = vmatprep.subr.mxu0 0.0
  %94 = vmatpush1.msra.mxu0 %v24
  %95 = vmatprep.subr.mxu0 0.0
  %96 = vmatpush1.msra.mxu0 %v25
  %97 = vmatprep.subr.mxu0 0.0
  %98 = vmatpush1.msra.mxu0 %v26
  %99 = vmatprep.subr.mxu0 0.0
  %100 = vmatpush1.msra.mxu0 %v27
  %101 = vmatprep.subr.mxu0 0.0
  %102 = vmatpush1.msra.mxu0 %v28
  %103 = vmatprep.subr.mxu0 0.0
  %104 = vmatpush1.msra.mxu0 %v29
  %105 = vmatprep.subr.mxu0 0.0
  %106 = vmatpush1.msra.mxu0 %v30
  %107 = vmatprep.subr.mxu0 0.0
  %108 = vmatpush1.msra.mxu0 %v31
  %109 = vmatprep.subr.mxu0 0.0
  %110 = vmatpush1.msra.mxu0 %v32
  %111 = vmatprep.subr.mxu0 0.0
  %112 = vmatpush1.msra.mxu0 %v33
  %113 = vmatprep.subr.mxu0 0.0
  %114 = vmatpush1.msra.mxu0 %v34
  %115 = vmatprep.subr.mxu0 0.0
  %116 = vmatpush1.msra.mxu0 %v35
  %117 = vmatprep.subr.mxu0 0.0
  %118 = vmatpush1.msra.mxu0 %v36
  %119 = vmatprep.subr.mxu0 0.0
  %120 = vmatpush1.msra.mxu0 %v37
  %121 = vmatprep.subr.mxu0 0.0
  %122 = vmatpush1.msra.mxu0 %v38
  %123 = vmatprep.subr.mxu0 0.0
  %124 = vmatpush1.msra.mxu0 %v39
  %125 = vmatprep.subr.mxu0 0.0
  %126 = vmatpush1.msra.mxu0 %v40
  %127 = vmatprep.subr.mxu0 0.0
  %128 = vmatpush1.msra.mxu0 %v41
  %129 = vmatprep.subr.mxu0 0.0
  %130 = vmatpush1.msra.mxu0 %v42
  %131 = vmatprep.subr.mxu0 0.0
  %132 = vmatpush1.msra.mxu0 %v43
  %133 = vmatprep.subr.mxu0 0.0
  %134 = vmatpush1.msra.mxu0 %v44
  %135 = vmatprep.subr.mxu0 0.0
  %136 = vmatpush1.msra.mxu0 %v45
  %137 = vmatprep.subr.mxu0 0.0
  %138 = vmatpush1.msra.mxu0 %v46
  %139 = vmatprep.subr.mxu0 0.0
  %140 = vmatpush1.msra.mxu0 %v47
  %141 = vmatprep.subr.mxu0 0.0
  %142 = vmatpush1.msra.mxu0 %v48
  %143 = vmatprep.subr.mxu0 0.0
  %144 = vmatpush1.msra.mxu0 %v49
  %145 = vmatprep.subr.mxu0 0.0
  %146 = vmatpush1.msra.mxu0 %v50
  %147 = vmatprep.mubr.f32.mxu0 %v12
  %148 = vmatmul.mubr.f32.gmra.mrb[0].mxu0 %v11
  %v149 = vpop.f32.mrb[0].mxu0
  %v150 = vadd.f32 0.0, %v149
  %v151 = vpop.f32.mrb[0].mxu0
  %152 = vmatprep.mubr.f32.mxu0 %v16
  %153 = vmatmul.mubr.f32.gmra.mrb[0].mxu0 %v15
  %v154 = vpop.f32.mrb[0].mxu0
  %v155 = vadd.f32 0.0, %v154
  %v156 = vpop.f32.mrb[0].mxu0
  %157 = vdwg.mxu0
  %158 = vmatprep.subr.mxu0 0.0
  %159 = vmatpush1.msra.mxu0 %v51
  %160 = vmatprep.subr.mxu0 0.0
  %161 = vmatpush1.msra.mxu0 %v52
  %162 = vmatprep.subr.mxu0 0.0
  %163 = vmatpush1.msra.mxu0 %v53
  %164 = vmatprep.subr.mxu0 0.0
  %165 = vmatpush1.msra.mxu0 %v54
  %166 = vmatprep.subr.mxu0 0.0
  %167 = vmatpush1.msra.mxu0 %v55
  %168 = vmatprep.subr.mxu0 0.0
  %169 = vmatpush1.msra.mxu0 %v56
  %170 = vmatprep.subr.mxu0 0.0
  %171 = vmatpush1.msra.mxu0 %v57
  %172 = vmatprep.subr.mxu0 0.0
  %173 = vmatpush1.msra.mxu0 %v58
  %174 = vmatprep.subr.mxu0 0.0
  %175 = vmatpush1.msra.mxu0 %v59
  %176 = vmatprep.subr.mxu0 0.0
  %177 = vmatpush1.msra.mxu0 %v60
  %178 = vmatprep.subr.mxu0 0.0
  %179 = vmatpush1.msra.mxu0 %v61
  %180 = vmatprep.subr.mxu0 0.0
  %181 = vmatpush1.msra.mxu0 %v62
  %182 = vmatprep.subr.mxu0 0.0
  %183 = vmatpush1.msra.mxu0 %v63
  %184 = vmatprep.subr.mxu0 0.0
  %185 = vmatpush1.msra.mxu0 %v64
  %186 = vmatprep.subr.mxu0 0.0
  %187 = vmatpush1.msra.mxu0 %v65
  %188 = vmatprep.subr.mxu0 0.0
  %189 = vmatpush1.msra.mxu0 %v66
  %190 = vmatprep.subr.mxu0 0.0
  %191 = vmatpush1.msra.mxu0 %v67
  %192 = vmatprep.subr.mxu0 0.0
  %193 = vmatpush1.msra.mxu0 %v68
  %194 = vmatprep.subr.mxu0 0.0
  %195 = vmatpush1.msra.mxu0 %v69
  %196 = vmatprep.subr.mxu0 0.0
  %197 = vmatpush1.msra.mxu0 %v70
  %198 = vmatprep.subr.mxu0 0.0
  %199 = vmatpush1.msra.mxu0 %v71
  %200 = vmatprep.subr.mxu0 0.0
  %201 = vmatpush1.msra.mxu0 %v72
  %202 = vmatprep.subr.mxu0 0.0
  %203 = vmatpush1.msra.mxu0 %v73
  %204 = vmatprep.subr.mxu0 0.0
  %205 = vmatpush1.msra.mxu0 %v74
  %206 = vmatprep.subr.mxu0 0.0
  %207 = vmatpush1.msra.mxu0 %v75
  %208 = vmatprep.subr.mxu0 0.0
  %209 = vmatpush1.msra.mxu0 %v76
  %210 = vmatprep.subr.mxu0 0.0
  %211 = vmatpush1.msra.mxu0 %v77
  %212 = vmatprep.subr.mxu0 0.0
  %213 = vmatpush1.msra.mxu0 %v78
  %214 = vmatprep.subr.mxu0 0.0
  %215 = vmatpush1.msra.mxu0 %v79
  %216 = vmatprep.subr.mxu0 0.0
  %217 = vmatpush1.msra.mxu0 %v80
  %218 = vmatprep.subr.mxu0 0.0
  %219 = vmatpush1.msra.mxu0 %v81
  %220 = vmatprep.subr.mxu0 0.0
  %221 = vmatpush1.msra.mxu0 %v82
  %222 = vmatprep.mubr.f32.mxu0 %v14
  %223 = vmatmul.mubr.f32.gmra.mrb[0].mxu0 %v13
  %v224 = vpop.f32.mrb[0].mxu0
  %v225 = vadd.f32 %v150, %v224
  %v226 = vpop.f32.mrb[0].mxu0
  %227 = vmatprep.mubr.f32.mxu0 %v18
  %228 = vmatmul.mubr.f32.gmra.mrb[0].mxu0 %v17
  %v229 = vpop.f32.mrb[0].mxu0
  %v230 = vadd.f32 %v155, %v229
  %v231 = vpop.f32.mrb[0].mxu0
  %232 = vdwg.mxu0
  %vm233 = vcmask 162816
  %234 = vst.msk [vmem:[%s2] sm:$0xff] %vm233, %v225
  %235 = vst.msk [vmem:[%s2 + $0x8] sm:$0xff] %vm233, %v230
  // Predicated region
  $region10: #{forward.3} parent=0 // pred_check
    _
  $region11: #{forward.3} parent=0 // pred_check_branch
    %237 = sbr.rel (0) target = $region13
  $region12: #{forward.3} parent=0 // pred_region
    _
  $region13: #{forward.3} parent=0 // pred_fallthru
    _
  // Predicated region
  $region14: #{forward.3} parent=0 // pred_check
    _
  $region15: #{forward.3} parent=0 // pred_check_branch
    %239 = sbr.rel (0) target = $region17
  $region16: #{forward.3} parent=0 // pred_region
    _
  $region17: #{forward.3} parent=0 // pred_fallthru
    _

// kernel: forward.5
$region0: #{forward.5}
  #allocation0 [shape = 'u32[]', space=smem, size = 0x4, offset = 0x4, fixed_abs, tag = 'smem constant byte address 0x4 - core index']
  #allocation1 [shape = 'u32[144,128]{1,0:T(1,128)}', space=vmem, size = 0x12000, scoped, tag = 'internal scratch']
  %s0 = inlined_call_operand.vmem [shape: bf16[2,160], index: 0, kind: input, shape index: {}]
  %s1 = inlined_call_operand.vmem [shape: bf16[160,1024], index: 1, kind: input, shape index: {}]
  %s2 = inlined_call_operand.vmem [shape: f32[1,1024], index: 2, kind: input, shape index: {}]
  %s3 = inlined_call_operand.vmem [shape: f32[2,1024], index: 3, kind: output, shape index: {}]
  %s4 = sld [smem:[#allocation0]]
  $region22: #{forward.5} parent=0
    _
  %s6 = ssub.s32 1, %s4
  %s7 = scalar_select 0, %s6, %s4
  // Predicated region
  $region2: #{forward.5} parent=0 // pred_check
    _
  $region3: #{forward.5} parent=0 // pred_check_branch
    %9 = sbr.rel (0) target = $region5
  $region4: #{forward.5} parent=0 // pred_region
    _
  $region5: #{forward.5} parent=0 // pred_fallthru
    _
  // Predicated region
  $region6: #{forward.5} parent=0 // pred_check
    _
  $region7: #{forward.5} parent=0 // pred_check_branch
    %11 = sbr.rel (0) target = $region9
  $region8: #{forward.5} parent=0 // pred_region
    _
  $region9: #{forward.5} parent=0 // pred_fallthru
    _
  // Predicated region
  $region10: #{forward.5} parent=0 // pred_check
    _
  $region11: #{forward.5} parent=0 // pred_check_branch
    %13 = sbr.rel (0) target = $region13
  $region12: #{forward.5} parent=0 // pred_region
    _
  $region13: #{forward.5} parent=0 // pred_fallthru
    _
  %v15 = vld [vmem:[%s0] sm:$0x3]
  %v16 = vld [vmem:[%s1] sm:$0xff]
  %v17 = vld [vmem:[%s1 + $0x8] sm:$0xff]
  %v18 = vld [vmem:[%s1 + $0x10] sm:$0xff]
  %v19 = vld [vmem:[%s1 + $0x18] sm:$0xff]
  %v20 = vld [vmem:[%s1 + $0x20] sm:$0xff]
  %v21 = vld [vmem:[%s1 + $0x28] sm:$0xff]
  %v22 = vld [vmem:[%s1 + $0x30] sm:$0xff]
  %v23 = vld [vmem:[%s1 + $0x38] sm:$0xff]
  %v24 = vld [vmem:[%s1 + $0x40] sm:$0xff]
  %v25 = vld [vmem:[%s1 + $0x48] sm:$0xff]
  %v26 = vld [vmem:[%s1 + $0x50] sm:$0xff]
  %v27 = vld [vmem:[%s1 + $0x58] sm:$0xff]
  %v28 = vld [vmem:[%s1 + $0x60] sm:$0xff]
  %v29 = vld [vmem:[%s1 + $0x68] sm:$0xff]
  %v30 = vld [vmem:[%s1 + $0x70] sm:$0xff]
  %v31 = vld [vmem:[%s1 + $0x78] sm:$0xff]
  %v32 = vld [vmem:[%s1 + $0x80] sm:$0xff]
  %v33 = vld [vmem:[%s1 + $0x88] sm:$0xff]
  %v34 = vld [vmem:[%s1 + $0x90] sm:$0xff]
  %v35 = vld [vmem:[%s1 + $0x98] sm:$0xff]
  %v36 = vld [vmem:[%s1 + $0xa0] sm:$0xff]
  %v37 = vld [vmem:[%s1 + $0xa8] sm:$0xff]
  %v38 = vld [vmem:[%s1 + $0xb0] sm:$0xff]
  %v39 = vld [vmem:[%s1 + $0xb8] sm:$0xff]
  %v40 = vld [vmem:[%s1 + $0xc0] sm:$0xff]
  %v41 = vld [vmem:[%s1 + $0xc8] sm:$0xff]
  %v42 = vld [vmem:[%s1 + $0xd0] sm:$0xff]
  %v43 = vld [vmem:[%s1 + $0xd8] sm:$0xff]
  %v44 = vld [vmem:[%s1 + $0xe0] sm:$0xff]
  %v45 = vld [vmem:[%s1 + $0xe8] sm:$0xff]
  %v46 = vld [vmem:[%s1 + $0xf0] sm:$0xff]
  %v47 = vld [vmem:[%s1 + $0xf8] sm:$0xff]
  %v48 = vld [vmem:[%s1 + $0x100] sm:$0xff]
  %v49 = vld [vmem:[%s1 + $0x108] sm:$0xff]
  %v50 = vld [vmem:[%s1 + $0x110] sm:$0xff]
  %v51 = vld [vmem:[%s1 + $0x118] sm:$0xff]
  %v52 = vld [vmem:[%s1 + $0x120] sm:$0xff]
  %v53 = vld [vmem:[%s1 + $0x128] sm:$0xff]
  %v54 = vld [vmem:[%s1 + $0x130] sm:$0xff]
  %v55 = vld [vmem:[%s1 + $0x138] sm:$0xff]
  %v56 = vld [vmem:[%s1 + $0x140] sm:$0xff]
  %v57 = vld [vmem:[%s1 + $0x148] sm:$0xff]
  %v58 = vld [vmem:[%s1 + $0x150] sm:$0xff]
  %v59 = vld [vmem:[%s1 + $0x158] sm:$0xff]
  %v60 = vld [vmem:[%s1 + $0x160] sm:$0xff]
  %v61 = vld [vmem:[%s1 + $0x168] sm:$0xff]
  %v62 = vld [vmem:[%s1 + $0x170] sm:$0xff]
  %v63 = vld [vmem:[%s1 + $0x178] sm:$0xff]
  %v64 = vld [vmem:[%s1 + $0x180] sm:$0xff]
  %v65 = vld [vmem:[%s1 + $0x188] sm:$0xff]
  %v66 = vld [vmem:[%s1 + $0x190] sm:$0xff]
  %v67 = vld [vmem:[%s1 + $0x198] sm:$0xff]
  %v68 = vld [vmem:[%s1 + $0x1a0] sm:$0xff]
  %v69 = vld [vmem:[%s1 + $0x1a8] sm:$0xff]
  %v70 = vld [vmem:[%s1 + $0x1b0] sm:$0xff]
  %v71 = vld [vmem:[%s1 + $0x1b8] sm:$0xff]
  %v72 = vld [vmem:[%s1 + $0x1c0] sm:$0xff]
  %v73 = vld [vmem:[%s1 + $0x1c8] sm:$0xff]
  %v74 = vld [vmem:[%s1 + $0x1d0] sm:$0xff]
  %v75 = vld [vmem:[%s1 + $0x1d8] sm:$0xff]
  %v76 = vld [vmem:[%s1 + $0x1e0] sm:$0xff]
  %v77 = vld [vmem:[%s1 + $0x1e8] sm:$0xff]
  %v78 = vld [vmem:[%s1 + $0x1f0] sm:$0xff]
  %v79 = vld [vmem:[%s1 + $0x1f8] sm:$0xff]
  %v80 = vld [vmem:[%s1 + $0x200] sm:$0xff]
  %v81 = vld [vmem:[%s1 + $0x208] sm:$0xff]
  %v82 = vld [vmem:[%s1 + $0x210] sm:$0xff]
  %v83 = vld [vmem:[%s1 + $0x218] sm:$0xff]
  %v84 = vld [vmem:[%s1 + $0x220] sm:$0xff]
  %v85 = vld [vmem:[%s1 + $0x228] sm:$0xff]
  %v86 = vld [vmem:[%s1 + $0x230] sm:$0xff]
  %v87 = vld [vmem:[%s1 + $0x238] sm:$0xff]
  %v88 = vld [vmem:[%s1 + $0x240] sm:$0xff]
  %v89 = vld [vmem:[%s1 + $0x248] sm:$0xff]
  %v90 = vld [vmem:[%s1 + $0x250] sm:$0xff]
  %v91 = vld [vmem:[%s1 + $0x258] sm:$0xff]
  %v92 = vld [vmem:[%s1 + $0x260] sm:$0xff]
  %v93 = vld [vmem:[%s1 + $0x268] sm:$0xff]
  %v94 = vld [vmem:[%s1 + $0x270] sm:$0xff]
  %v95 = vld [vmem:[%s1 + $0x278] sm:$0xff]
  %v96 = vld [vmem:[%s2] sm:$0xff]
  %v98 = vlaneseq
  %v99 = vshrl.u32 %v98, 7
  %v100 = vsub.s32 0, %v99
  %v101 = vrot.slane %v96, %v100
  %v102 = vlaneseq
  %v103 = vshrl.u32 %v102, 7
  %v104 = vsub.s32 1, %v103
  %v105 = vrot.slane %v96, %v104
  %v106 = vlaneseq
  %v107 = vshrl.u32 %v106, 7
  %v108 = vsub.s32 2, %v107
  %v109 = vrot.slane %v96, %v108
  %v110 = vlaneseq
  %v111 = vshrl.u32 %v110, 7
  %v112 = vsub.s32 3, %v111
  %v113 = vrot.slane %v96, %v112
  %v114 = vlaneseq
  %v115 = vshrl.u32 %v114, 7
  %v116 = vsub.s32 4, %v115
  %v117 = vrot.slane %v96, %v116
  %v118 = vlaneseq
  %v119 = vshrl.u32 %v118, 7
  %v120 = vsub.s32 5, %v119
  %v121 = vrot.slane %v96, %v120
  %v122 = vlaneseq
  %v123 = vshrl.u32 %v122, 7
  %v124 = vsub.s32 6, %v123
  %v125 = vrot.slane %v96, %v124
  %v126 = vlaneseq
  %v127 = vshrl.u32 %v126, 7
  %v128 = vsub.s32 7, %v127
  %v129 = vrot.slane %v96, %v128
  %v140 = vunpack.c.l.s4 1966171168
  %v141 = vunpack.c.0.s8 %v140
  %v142 = vlaneseq
  %v143 = vshrl.u32 %v142, 7
  %v144 = vsub.s32 %v141, %v143
  %v145 = vrot.slane %v15, %v144
  %v146 = vcombine.high %v145, %v145
  %v148 = vunpack.c.l.s4 1966171168
  %v149 = vunpack.c.0.s8 %v148
  %v150 = vlaneseq
  %v151 = vshrl.u32 %v150, 7
  %v152 = vsub.s32 %v149, %v151
  %v153 = vrot.slane %v145, %v152
  %v155 = vunpack.c.l.s4 1966171168
  %v156 = vunpack.c.0.s8 %v155
  %v157 = vlaneseq
  %v158 = vshrl.u32 %v157, 7
  %v159 = vsub.s32 %v156, %v158
  %v160 = vrot.slane %v146, %v159
  %v242 = vunpack.c.l.b16 %v16
  %v243 = vunpack.c.h.b16 %v16
  %v244 = vunpack.c.l.b16 %v17
  %v245 = vunpack.c.h.b16 %v17
  %v246 = vunpack.c.l.b16 %v18
  %v247 = vunpack.c.h.b16 %v18
  %v248 = vunpack.c.l.b16 %v19
  %v249 = vunpack.c.h.b16 %v19
  %v250 = vunpack.c.l.b16 %v20
  %v251 = vunpack.c.h.b16 %v20
  %v252 = vunpack.c.l.b16 %v21
  %v253 = vunpack.c.h.b16 %v21
  %v254 = vunpack.c.l.b16 %v22
  %v255 = vunpack.c.h.b16 %v22
  %v256 = vunpack.c.l.b16 %v23
  %v257 = vunpack.c.h.b16 %v23
  %v258 = vunpack.c.l.b16 %v24
  %v259 = vunpack.c.h.b16 %v24
  %v260 = vunpack.c.l.b16 %v25
  %v261 = vunpack.c.h.b16 %v25
  %v262 = vunpack.c.l.b16 %v26
  %v263 = vunpack.c.h.b16 %v26
  %v264 = vunpack.c.l.b16 %v27
  %v265 = vunpack.c.h.b16 %v27
  %v266 = vunpack.c.l.b16 %v28
  %v267 = vunpack.c.h.b16 %v28
  %v268 = vunpack.c.l.b16 %v29
  %v269 = vunpack.c.h.b16 %v29
  %v270 = vunpack.c.l.b16 %v30
  %v271 = vunpack.c.h.b16 %v30
  %v272 = vunpack.c.l.b16 %v31
  %v273 = vunpack.c.h.b16 %v31
  %v274 = vunpack.c.l.b16 %v32
  %v275 = vunpack.c.h.b16 %v32
  %v276 = vunpack.c.l.b16 %v33
  %v277 = vunpack.c.h.b16 %v33
  %v278 = vunpack.c.l.b16 %v34
  %v279 = vunpack.c.h.b16 %v34
  %v280 = vunpack.c.l.b16 %v35
  %v281 = vunpack.c.h.b16 %v35
  %v282 = vunpack.c.l.b16 %v36
  %v283 = vunpack.c.h.b16 %v36
  %v284 = vunpack.c.l.b16 %v37
  %v285 = vunpack.c.h.b16 %v37
  %v286 = vunpack.c.l.b16 %v38
  %v287 = vunpack.c.h.b16 %v38
  %v288 = vunpack.c.l.b16 %v39
  %v289 = vunpack.c.h.b16 %v39
  %v290 = vunpack.c.l.b16 %v40
  %v291 = vunpack.c.h.b16 %v40
  %v292 = vunpack.c.l.b16 %v41
  %v293 = vunpack.c.h.b16 %v41
  %v294 = vunpack.c.l.b16 %v42
  %v295 = vunpack.c.h.b16 %v42
  %v296 = vunpack.c.l.b16 %v43
  %v297 = vunpack.c.h.b16 %v43
  %v298 = vunpack.c.l.b16 %v44
  %v299 = vunpack.c.h.b16 %v44
  %v300 = vunpack.c.l.b16 %v45
  %v301 = vunpack.c.h.b16 %v45
  %v302 = vunpack.c.l.b16 %v46
  %v303 = vunpack.c.h.b16 %v46
  %v304 = vunpack.c.l.b16 %v47
  %v305 = vunpack.c.h.b16 %v47
  %v306 = vunpack.c.l.b16 %v48
  %v307 = vunpack.c.h.b16 %v48
  %v308 = vunpack.c.l.b16 %v49
  %v309 = vunpack.c.h.b16 %v49
  %v310 = vunpack.c.l.b16 %v50
  %v311 = vunpack.c.h.b16 %v50
  %v312 = vunpack.c.l.b16 %v51
  %v313 = vunpack.c.h.b16 %v51
  %v314 = vunpack.c.l.b16 %v52
  %v315 = vunpack.c.h.b16 %v52
  %v316 = vunpack.c.l.b16 %v53
  %v317 = vunpack.c.h.b16 %v53
  %v318 = vunpack.c.l.b16 %v54
  %v319 = vunpack.c.h.b16 %v54
  %v320 = vunpack.c.l.b16 %v55
  %v321 = vunpack.c.h.b16 %v55
  %v322 = vunpack.c.l.b16 %v56
  %v323 = vunpack.c.h.b16 %v56
  %v324 = vunpack.c.l.b16 %v57
  %v325 = vunpack.c.h.b16 %v57
  %v326 = vunpack.c.l.b16 %v58
  %v327 = vunpack.c.h.b16 %v58
  %v328 = vunpack.c.l.b16 %v59
  %v329 = vunpack.c.h.b16 %v59
  %v330 = vunpack.c.l.b16 %v60
  %v331 = vunpack.c.h.b16 %v60
  %v332 = vunpack.c.l.b16 %v61
  %v333 = vunpack.c.h.b16 %v61
  %v334 = vunpack.c.l.b16 %v62
  %v335 = vunpack.c.h.b16 %v62
  %v336 = vunpack.c.l.b16 %v63
  %v337 = vunpack.c.h.b16 %v63
  %v338 = vunpack.c.l.b16 %v64
  %v339 = vunpack.c.h.b16 %v64
  %v340 = vunpack.c.l.b16 %v65
  %v341 = vunpack.c.h.b16 %v65
  %v342 = vunpack.c.l.b16 %v66
  %v343 = vunpack.c.h.b16 %v66
  %v344 = vunpack.c.l.b16 %v67
  %v345 = vunpack.c.h.b16 %v67
  %v346 = vunpack.c.l.b16 %v68
  %v347 = vunpack.c.h.b16 %v68
  %v348 = vunpack.c.l.b16 %v69
  %v349 = vunpack.c.h.b16 %v69
  %v350 = vunpack.c.l.b16 %v70
  %v351 = vunpack.c.h.b16 %v70
  %v352 = vunpack.c.l.b16 %v71
  %v353 = vunpack.c.h.b16 %v71
  %v354 = vunpack.c.l.b16 %v72
  %v355 = vunpack.c.h.b16 %v72
  %v356 = vunpack.c.l.b16 %v73
  %v357 = vunpack.c.h.b16 %v73
  %v358 = vunpack.c.l.b16 %v74
  %v359 = vunpack.c.h.b16 %v74
  %v360 = vunpack.c.l.b16 %v75
  %v361 = vunpack.c.h.b16 %v75
  %v362 = vunpack.c.l.b16 %v76
  %v363 = vunpack.c.h.b16 %v76
  %v364 = vunpack.c.l.b16 %v77
  %v365 = vunpack.c.h.b16 %v77
  %v366 = vunpack.c.l.b16 %v78
  %v367 = vunpack.c.h.b16 %v78
  %v368 = vunpack.c.l.b16 %v79
  %v369 = vunpack.c.h.b16 %v79
  %v370 = vunpack.c.l.b16 %v80
  %v371 = vunpack.c.h.b16 %v80
  %v372 = vunpack.c.l.b16 %v81
  %v373 = vunpack.c.h.b16 %v81
  %v374 = vunpack.c.l.b16 %v82
  %v375 = vunpack.c.h.b16 %v82
  %v376 = vunpack.c.l.b16 %v83
  %v377 = vunpack.c.h.b16 %v83
  %v378 = vunpack.c.l.b16 %v84
  %v379 = vunpack.c.h.b16 %v84
  %v380 = vunpack.c.l.b16 %v85
  %v381 = vunpack.c.h.b16 %v85
  %v382 = vunpack.c.l.b16 %v86
  %v383 = vunpack.c.h.b16 %v86
  %v384 = vunpack.c.l.b16 %v87
  %v385 = vunpack.c.h.b16 %v87
  %v386 = vunpack.c.l.b16 %v88
  %v387 = vunpack.c.h.b16 %v88
  %v388 = vunpack.c.l.b16 %v89
  %v389 = vunpack.c.h.b16 %v89
  %v390 = vunpack.c.l.b16 %v90
  %v391 = vunpack.c.h.b16 %v90
  %v392 = vunpack.c.l.b16 %v91
  %v393 = vunpack.c.h.b16 %v91
  %v394 = vunpack.c.l.b16 %v92
  %v395 = vunpack.c.h.b16 %v92
  %v396 = vunpack.c.l.b16 %v93
  %v397 = vunpack.c.h.b16 %v93
  %v398 = vunpack.c.l.b16 %v94
  %v399 = vunpack.c.h.b16 %v94
  %v400 = vunpack.c.l.b16 %v95
  %v401 = vunpack.c.h.b16 %v95
  %v402 = vpack.c.b16 %v250, %v242
  %v403 = vpack.c.b16 %v251, %v243
  %v404 = vpack.c.b16 %v252, %v244
  %v405 = vpack.c.b16 %v253, %v245
  %v406 = vpack.c.b16 %v254, %v246
  %v407 = vpack.c.b16 %v255, %v247
  %v408 = vpack.c.b16 %v256, %v248
  %v409 = vpack.c.b16 %v257, %v249
  %v410 = vpack.c.b16 %v266, %v258
  %v411 = vpack.c.b16 %v267, %v259
  %v412 = vpack.c.b16 %v268, %v260
  %v413 = vpack.c.b16 %v269, %v261
  %v414 = vpack.c.b16 %v270, %v262
  %v415 = vpack.c.b16 %v271, %v263
  %v416 = vpack.c.b16 %v272, %v264
  %v417 = vpack.c.b16 %v273, %v265
  %v418 = vpack.c.b16 %v282, %v274
  %v419 = vpack.c.b16 %v283, %v275
  %v420 = vpack.c.b16 %v284, %v276
  %v421 = vpack.c.b16 %v285, %v277
  %v422 = vpack.c.b16 %v286, %v278
  %v423 = vpack.c.b16 %v287, %v279
  %v424 = vpack.c.b16 %v288, %v280
  %v425 = vpack.c.b16 %v289, %v281
  %v426 = vpack.c.b16 %v298, %v290
  %v427 = vpack.c.b16 %v299, %v291
  %v428 = vpack.c.b16 %v300, %v292
  %v429 = vpack.c.b16 %v301, %v293
  %v430 = vpack.c.b16 %v302, %v294
  %v431 = vpack.c.b16 %v303, %v295
  %v432 = vpack.c.b16 %v304, %v296
  %v433 = vpack.c.b16 %v305, %v297
  %v434 = vpack.c.b16 %v314, %v306
  %v435 = vpack.c.b16 %v315, %v307
  %v436 = vpack.c.b16 %v316, %v308
  %v437 = vpack.c.b16 %v317, %v309
  %v438 = vpack.c.b16 %v318, %v310
  %v439 = vpack.c.b16 %v319, %v311
  %v440 = vpack.c.b16 %v320, %v312
  %v441 = vpack.c.b16 %v321, %v313
  %v442 = vpack.c.b16 %v330, %v322
  %v443 = vpack.c.b16 %v331, %v323
  %v444 = vpack.c.b16 %v332, %v324
  %v445 = vpack.c.b16 %v333, %v325
  %v446 = vpack.c.b16 %v334, %v326
  %v447 = vpack.c.b16 %v335, %v327
  %v448 = vpack.c.b16 %v336, %v328
  %v449 = vpack.c.b16 %v337, %v329
  %v450 = vpack.c.b16 %v346, %v338
  %v451 = vpack.c.b16 %v347, %v339
  %v452 = vpack.c.b16 %v348, %v340
  %v453 = vpack.c.b16 %v349, %v341
  %v454 = vpack.c.b16 %v350, %v342
  %v455 = vpack.c.b16 %v351, %v343
  %v456 = vpack.c.b16 %v352, %v344
  %v457 = vpack.c.b16 %v353, %v345
  %v458 = vpack.c.b16 %v362, %v354
  %v459 = vpack.c.b16 %v363, %v355
  %v460 = vpack.c.b16 %v364, %v356
  %v461 = vpack.c.b16 %v365, %v357
  %v462 = vpack.c.b16 %v366, %v358
  %v463 = vpack.c.b16 %v367, %v359
  %v464 = vpack.c.b16 %v368, %v360
  %v465 = vpack.c.b16 %v369, %v361
  %v466 = vpack.c.b16 %v378, %v370
  %v467 = vpack.c.b16 %v379, %v371
  %v468 = vpack.c.b16 %v380, %v372
  %v469 = vpack.c.b16 %v381, %v373
  %v470 = vpack.c.b16 %v382, %v374
  %v471 = vpack.c.b16 %v383, %v375
  %v472 = vpack.c.b16 %v384, %v376
  %v473 = vpack.c.b16 %v385, %v377
  %v474 = vpack.c.b16 %v394, %v386
  %v475 = vpack.c.b16 %v395, %v387
  %v476 = vpack.c.b16 %v396, %v388
  %v477 = vpack.c.b16 %v397, %v389
  %v478 = vpack.c.b16 %v398, %v390
  %v479 = vpack.c.b16 %v399, %v391
  %v480 = vpack.c.b16 %v400, %v392
  %v481 = vpack.c.b16 %v401, %v393
  %vm562 = vcmask 261120
  %v564 = vsel %vm562, %v160, 0
  %566 = vmatprep.subr.bf16.mxu0 %v403
  %567 = vmatpush1.bf16.msra.mxu0 %v402
  %568 = vmatprep.subr.bf16.mxu0 %v411
  %569 = vmatpush1.bf16.msra.mxu0 %v410
  %570 = vmatprep.subr.bf16.mxu0 %v419
  %571 = vmatpush1.bf16.msra.mxu0 %v418
  %572 = vmatprep.subr.bf16.mxu0 %v427
  %573 = vmatpush1.bf16.msra.mxu0 %v426
  %574 = vmatprep.subr.bf16.mxu0 %v435
  %575 = vmatpush1.bf16.msra.mxu0 %v434
  %576 = vmatprep.subr.bf16.mxu0 %v443
  %577 = vmatpush1.bf16.msra.mxu0 %v442
  %578 = vmatprep.subr.bf16.mxu0 %v451
  %579 = vmatpush1.bf16.msra.mxu0 %v450
  %580 = vmatprep.subr.bf16.mxu0 %v459
  %581 = vmatpush1.bf16.msra.mxu0 %v458
  %582 = vmatprep.subr.bf16.mxu0 %v467
  %583 = vmatpush1.bf16.msra.mxu0 %v466
  %584 = vmatprep.subr.bf16.mxu0 %v475
  %585 = vmatpush1.bf16.msra.mxu0 %v474
  %586 = vmatprep.subr.bf16.mxu0 0
  %587 = vmatpush1.bf16.msra.mxu0 0
  %588 = vmatprep.subr.bf16.mxu0 0
  %589 = vmatpush1.bf16.msra.mxu0 0
  %590 = vmatprep.subr.bf16.mxu0 0
  %591 = vmatpush1.bf16.msra.mxu0 0
  %592 = vmatprep.subr.bf16.mxu0 0
  %593 = vmatpush1.bf16.msra.mxu0 0
  %594 = vmatprep.subr.bf16.mxu0 0
  %595 = vmatpush1.bf16.msra.mxu0 0
  %596 = vmatprep.subr.bf16.mxu0 0
  %597 = vmatpush1.bf16.msra.mxu0 0
  %598 = vmatprep.mubr.bf16.mxu0 %v564
  %599 = vmatmul.mubr.bf16.gmra.mrb[0].mxu0 %v153
  %v600 = vpop.f32.mrb[0].mxu0
  %v601 = vadd.f32 %v101, %v600
  %v602 = vpop.f32.mrb[0].mxu0
  %v603 = vadd.f32 %v105, %v602
  %v604 = vpop.f32.mrb[0].mxu0
  %v605 = vpop.f32.mrb[0].mxu0
  %606 = vdwg.mxu0
  %607 = vmatprep.subr.bf16.mxu0 %v405
  %608 = vmatpush1.bf16.msra.mxu0 %v404
  %609 = vmatprep.subr.bf16.mxu0 %v413
  %610 = vmatpush1.bf16.msra.mxu0 %v412
  %611 = vmatprep.subr.bf16.mxu0 %v421
  %612 = vmatpush1.bf16.msra.mxu0 %v420
  %613 = vmatprep.subr.bf16.mxu0 %v429
  %614 = vmatpush1.bf16.msra.mxu0 %v428
  %615 = vmatprep.subr.bf16.mxu0 %v437
  %616 = vmatpush1.bf16.msra.mxu0 %v436
  %617 = vmatprep.subr.bf16.mxu0 %v445
  %618 = vmatpush1.bf16.msra.mxu0 %v444
  %619 = vmatprep.subr.bf16.mxu0 %v453
  %620 = vmatpush1.bf16.msra.mxu0 %v452
  %621 = vmatprep.subr.bf16.mxu0 %v461
  %622 = vmatpush1.bf16.msra.mxu0 %v460
  %623 = vmatprep.subr.bf16.mxu0 %v469
  %624 = vmatpush1.bf16.msra.mxu0 %v468
  %625 = vmatprep.subr.bf16.mxu0 %v477
  %626 = vmatpush1.bf16.msra.mxu0 %v476
  %627 = vmatprep.subr.bf16.mxu0 0
  %628 = vmatpush1.bf16.msra.mxu0 0
  %629 = vmatprep.subr.bf16.mxu0 0
  %630 = vmatpush1.bf16.msra.mxu0 0
  %631 = vmatprep.subr.bf16.mxu0 0
  %632 = vmatpush1.bf16.msra.mxu0 0
  %633 = vmatprep.subr.bf16.mxu0 0
  %634 = vmatpush1.bf16.msra.mxu0 0
  %635 = vmatprep.subr.bf16.mxu0 0
  %636 = vmatpush1.bf16.msra.mxu0 0
  %637 = vmatprep.subr.bf16.mxu0 0
  %638 = vmatpush1.bf16.msra.mxu0 0
  %639 = vmatprep.mubr.bf16.mxu0 %v564
  %640 = vmatmul.mubr.bf16.gmra.mrb[0].mxu0 %v153
  %v641 = vpop.f32.mrb[0].mxu0
  %v642 = vadd.f32 %v109, %v641
  %v643 = vpop.f32.mrb[0].mxu0
  %v644 = vadd.f32 %v113, %v643
  %v645 = vpop.f32.mrb[0].mxu0
  %v646 = vpop.f32.mrb[0].mxu0
  %647 = vdwg.mxu0
  %648 = vmatprep.subr.bf16.mxu0 %v407
  %649 = vmatpush1.bf16.msra.mxu0 %v406
  %650 = vmatprep.subr.bf16.mxu0 %v415
  %651 = vmatpush1.bf16.msra.mxu0 %v414
  %652 = vmatprep.subr.bf16.mxu0 %v423
  %653 = vmatpush1.bf16.msra.mxu0 %v422
  %654 = vmatprep.subr.bf16.mxu0 %v431
  %655 = vmatpush1.bf16.msra.mxu0 %v430
  %656 = vmatprep.subr.bf16.mxu0 %v439
  %657 = vmatpush1.bf16.msra.mxu0 %v438
  %658 = vmatprep.subr.bf16.mxu0 %v447
  %659 = vmatpush1.bf16.msra.mxu0 %v446
  %660 = vmatprep.subr.bf16.mxu0 %v455
  %661 = vmatpush1.bf16.msra.mxu0 %v454
  %662 = vmatprep.subr.bf16.mxu0 %v463
  %663 = vmatpush1.bf16.msra.mxu0 %v462
  %664 = vmatprep.subr.bf16.mxu0 %v471
  %665 = vmatpush1.bf16.msra.mxu0 %v470
  %666 = vmatprep.subr.bf16.mxu0 %v479
  %667 = vmatpush1.bf16.msra.mxu0 %v478
  %668 = vmatprep.subr.bf16.mxu0 0
  %669 = vmatpush1.bf16.msra.mxu0 0
  %670 = vmatprep.subr.bf16.mxu0 0
  %671 = vmatpush1.bf16.msra.mxu0 0
  %672 = vmatprep.subr.bf16.mxu0 0
  %673 = vmatpush1.bf16.msra.mxu0 0
  %674 = vmatprep.subr.bf16.mxu0 0
  %675 = vmatpush1.bf16.msra.mxu0 0
  %676 = vmatprep.subr.bf16.mxu0 0
  %677 = vmatpush1.bf16.msra.mxu0 0
  %678 = vmatprep.subr.bf16.mxu0 0
  %679 = vmatpush1.bf16.msra.mxu0 0
  %680 = vmatprep.mubr.bf16.mxu0 %v564
  %681 = vmatmul.mubr.bf16.gmra.mrb[0].mxu0 %v153
  %v682 = vpop.f32.mrb[0].mxu0
  %v683 = vadd.f32 %v117, %v682
  %v684 = vpop.f32.mrb[0].mxu0
  %v685 = vadd.f32 %v121, %v684
  %v686 = vpop.f32.mrb[0].mxu0
  %v687 = vpop.f32.mrb[0].mxu0
  %688 = vdwg.mxu0
  %689 = vmatprep.subr.bf16.mxu0 %v409
  %690 = vmatpush1.bf16.msra.mxu0 %v408
  %691 = vmatprep.subr.bf16.mxu0 %v417
  %692 = vmatpush1.bf16.msra.mxu0 %v416
  %693 = vmatprep.subr.bf16.mxu0 %v425
  %694 = vmatpush1.bf16.msra.mxu0 %v424
  %695 = vmatprep.subr.bf16.mxu0 %v433
  %696 = vmatpush1.bf16.msra.mxu0 %v432
  %697 = vmatprep.subr.bf16.mxu0 %v441
  %698 = vmatpush1.bf16.msra.mxu0 %v440
  %699 = vmatprep.subr.bf16.mxu0 %v449
  %700 = vmatpush1.bf16.msra.mxu0 %v448
  %701 = vmatprep.subr.bf16.mxu0 %v457
  %702 = vmatpush1.bf16.msra.mxu0 %v456
  %703 = vmatprep.subr.bf16.mxu0 %v465
  %704 = vmatpush1.bf16.msra.mxu0 %v464
  %705 = vmatprep.subr.bf16.mxu0 %v473
  %706 = vmatpush1.bf16.msra.mxu0 %v472
  %707 = vmatprep.subr.bf16.mxu0 %v481
  %708 = vmatpush1.bf16.msra.mxu0 %v480
  %709 = vmatprep.subr.bf16.mxu0 0
  %710 = vmatpush1.bf16.msra.mxu0 0
  %711 = vmatprep.subr.bf16.mxu0 0
  %712 = vmatpush1.bf16.msra.mxu0 0
  %713 = vmatprep.subr.bf16.mxu0 0
  %714 = vmatpush1.bf16.msra.mxu0 0
  %715 = vmatprep.subr.bf16.mxu0 0
  %716 = vmatpush1.bf16.msra.mxu0 0
  %717 = vmatprep.subr.bf16.mxu0 0
  %718 = vmatpush1.bf16.msra.mxu0 0
  %719 = vmatprep.subr.bf16.mxu0 0
  %720 = vmatpush1.bf16.msra.mxu0 0
  %721 = vmatprep.mubr.bf16.mxu0 %v564
  %722 = vmatmul.mubr.bf16.gmra.mrb[0].mxu0 %v153
  %v723 = vpop.f32.mrb[0].mxu0
  %v724 = vadd.f32 %v125, %v723
  %v725 = vpop.f32.mrb[0].mxu0
  %v726 = vadd.f32 %v129, %v725
  %v727 = vpop.f32.mrb[0].mxu0
  %v728 = vpop.f32.mrb[0].mxu0
  %729 = vdwg.mxu0
  %v738 = vcombine.low %v601, %v603
  %v739 = vcombine.low %v642, %v644
  %v741 = vunpack.c.l.s4 1983009808
  %v742 = vunpack.c.0.s8 %v741
  %v743 = vlaneseq
  %v744 = vshrl.u32 %v743, 7
  %v745 = vsub.s32 %v742, %v744
  %v746 = vrot.slane %v738, %v745
  %v748 = vunpack.c.l.s4 1983009808
  %v749 = vunpack.c.0.s8 %v748
  %v750 = vlaneseq
  %v751 = vshrl.u32 %v750, 7
  %v752 = vsub.s32 %v749, %v751
  %v753 = vrot.slane %v739, %v752
  %v754 = vcombine.low %v746, %v753
  %v755 = vcombine.low %v683, %v685
  %v756 = vcombine.low %v724, %v726
  %v758 = vunpack.c.l.s4 1983009808
  %v759 = vunpack.c.0.s8 %v758
  %v760 = vlaneseq
  %v761 = vshrl.u32 %v760, 7
  %v762 = vsub.s32 %v759, %v761
  %v763 = vrot.slane %v755, %v762
  %v765 = vunpack.c.l.s4 1983009808
  %v766 = vunpack.c.0.s8 %v765
  %v767 = vlaneseq
  %v768 = vshrl.u32 %v767, 7
  %v769 = vsub.s32 %v766, %v768
  %v770 = vrot.slane %v756, %v769
  %v771 = vcombine.low %v763, %v770
  %774 = vst [vmem:[%s3] sm:$0xff] %v754
  %775 = vst [vmem:[%s3 + $0x8] sm:$0xff] %v771
  // Predicated region
  $region14: #{forward.5} parent=0 // pred_check
    _
  $region15: #{forward.5} parent=0 // pred_check_branch
    %777 = sbr.rel (0) target = $region17
  $region16: #{forward.5} parent=0 // pred_region
    _
  $region17: #{forward.5} parent=0 // pred_fallthru
    _
  // Predicated region
  $region18: #{forward.5} parent=0 // pred_check
    _
  $region19: #{forward.5} parent=0 // pred_check_branch
    %779 = sbr.rel (0) target = $region21
  $region20: #{forward.5} parent=0 // pred_region
    _
  $region21: #{forward.5} parent=0 // pred_fallthru
    _

</llo_original>
